<compile_context>
chip_gen: v7x
topology: tpu7x:2x2x1
jax: 0.10.0
libtpu: 0.0.40
codegen_flags: <defaults>
</compile_context>

<pallas_src>
import functools

import jax
import jax.numpy as jnp
from jax import lax
from jax.experimental import pallas as pl
from jax.experimental.pallas import tpu as pltpu


def mha_kernel(q_ref, k_ref, v_ref,
               wq_ref, wk_ref, wv_ref,
               bq_ref, bk_ref, bv_ref,
               *refs, n_heads, d_k, return_attn):
    if return_attn:
        out_ref, attn_ref, qh_scr, kh_scr, vh_scr = refs
    else:
        out_ref, qh_scr, kh_scr, vh_scr = refs
        attn_ref = None

    h = pl.program_id(1)

    # ---- Projections: computed once per batch element (head == 0), cached in VMEM. --
    @pl.when(h == 0)
    def _project():
        # Full-width (S, D) @ (D, D) matmuls: bf16 MXU operands, f32 accumulation.
        # Inputs arrive f32 from HBM and are cast to bf16 on the VPU here.
        # The 1/sqrt(d_k) score scale is pre-folded into wq_ref / bq_ref.
        qp = jnp.dot(q_ref[0].astype(jnp.bfloat16), wq_ref[...],
                     preferred_element_type=jnp.float32) + bq_ref[...]
        kp = jnp.dot(k_ref[0].astype(jnp.bfloat16), wk_ref[...],
                     preferred_element_type=jnp.float32) + bk_ref[...]
        vp = jnp.dot(v_ref[0].astype(jnp.bfloat16), wv_ref[...],
                     preferred_element_type=jnp.float32) + bv_ref[...]
        # Head split with static lane slices into (n_heads, S, d_k) scratch
        # (no swapaxes / XLU transpose, no dynamic lane offsets).
        for hh in range(n_heads):
            sl = slice(hh * d_k, (hh + 1) * d_k)
            qh_scr[hh] = qp[:, sl].astype(jnp.bfloat16)
            kh_scr[hh] = kp[:, sl].astype(jnp.bfloat16)
            vh_scr[hh] = vp[:, sl].astype(jnp.bfloat16)

    # ---- One head per grid step. ----
    qh = qh_scr[h]      # (S, d_k) bf16, already scaled by 1/sqrt(d_k)
    kh = kh_scr[h]      # (S, d_k) bf16
    vh = vh_scr[h]      # (S, d_k) bf16

    # scores[q, k] = qh[q, :] . kh[k, :]   (no in-kernel transpose of kh)
    scores = lax.dot_general(qh, kh, (((1,), (1,)), ((), ())),
                             preferred_element_type=jnp.float32)        # (S, S) f32

    # Softmax.  Per-row max subtraction is mathematically identical to the reference's
    # global-max subtraction; with mask=None the denominator is >= 1, so the
    # reference's isnan guard is unnecessary.
    m = jnp.max(scores, axis=-1, keepdims=True)
    e = jnp.exp(scores - m)
    denom = jnp.sum(e, axis=-1, keepdims=True)
    p = e * pl.reciprocal(denom, approx=True)                           # (S, S) f32
    pb = p.astype(jnp.bfloat16)

    # ctx[q, d] = sum_k p[q, k] * vh[k, d]
    ctx = jnp.dot(pb, vh, preferred_element_type=jnp.float32)           # (S, d_k) f32

    # Head merge: write this head's d_k-wide stripe of the (1, S, D) output block.
    # The output block index is constant along the head axis, so the full lane-dense
    # (S, D) slab is written back to HBM only once per batch element.  Static-slice
    # stores selected by an unrolled pl.when keep all lane offsets compile-time
    # constants.
    for hh in range(n_heads):
        @pl.when(h == hh)
        def _store(hh=hh):
            out_ref[0, :, hh * d_k:(hh + 1) * d_k] = ctx.astype(out_ref.dtype)

    if attn_ref is not None:
        attn_ref[0, 0] = pb.astype(attn_ref.dtype)


def _vmem_limit_bytes():
    """Generation-aware VMEM limit: ~80% of physical capacity (v5e/v6e 128 MiB, v7x 64 MiB)."""
    try:
        cap = pltpu.get_tpu_info().vmem_capacity_bytes
    except Exception:
        cap = 64 * 2 ** 20   # conservative fallback that fits every generation
    return int(0.8 * cap)


def multi_head_attention(q, k, v, params, n_heads, *, return_attn=True,
                         attn_dtype=jnp.bfloat16, out_dtype=jnp.float32):
    """Pallas MHA (kq_same=False, keep_head=False, mask=None).

    Returns (output (B,S,D) out_dtype, attention (B,h,S,S) attn_dtype) when
    return_attn=True, else just the output.
    """
    B, S, D = q.shape
    d_k = D // n_heads
    wq, bq, wk, bk, wv, bv = params
    scale = 1.0 / (d_k ** 0.5)

    # Pre-transpose weights (out,in) -> (in,out) once in the wrapper, cast MXU operands
    # to bf16, and fold the 1/sqrt(d_k) score scale into Wq/bq (free, static weights).
    wq_t = (wq.T * scale).astype(jnp.bfloat16)
    wk_t = wk.T.astype(jnp.bfloat16)
    wv_t = wv.T.astype(jnp.bfloat16)
    bq2 = (bq * scale).reshape(1, D).astype(jnp.float32)
    bk2 = bk.reshape(1, D).astype(jnp.float32)
    bv2 = bv.reshape(1, D).astype(jnp.float32)

    kernel = functools.partial(mha_kernel, n_heads=n_heads, d_k=d_k,
                               return_attn=return_attn)

    out_shape = [jax.ShapeDtypeStruct((B, S, D), out_dtype)]
    out_specs = [pl.BlockSpec((1, S, D), lambda b, h: (b, 0, 0))]
    if return_attn:
        out_shape.append(jax.ShapeDtypeStruct((B, n_heads, S, S), attn_dtype))
        out_specs.append(pl.BlockSpec((1, 1, S, S), lambda b, h: (b, h, 0, 0)))

    results = pl.pallas_call(
        kernel,
        out_shape=tuple(out_shape),
        grid=(B, n_heads),
        in_specs=[
            pl.BlockSpec((1, S, D), lambda b, h: (b, 0, 0)),   # q   (fetched once per b)
            pl.BlockSpec((1, S, D), lambda b, h: (b, 0, 0)),   # k
            pl.BlockSpec((1, S, D), lambda b, h: (b, 0, 0)),   # v
            pl.BlockSpec((D, D), lambda b, h: (0, 0)),          # Wq^T * scale
            pl.BlockSpec((D, D), lambda b, h: (0, 0)),          # Wk^T
            pl.BlockSpec((D, D), lambda b, h: (0, 0)),          # Wv^T
            pl.BlockSpec((1, D), lambda b, h: (0, 0)),          # bq * scale
            pl.BlockSpec((1, D), lambda b, h: (0, 0)),          # bk
            pl.BlockSpec((1, D), lambda b, h: (0, 0)),          # bv
        ],
        out_specs=tuple(out_specs),
        scratch_shapes=[
            pltpu.VMEM((n_heads, S, d_k), jnp.bfloat16),   # projected q heads
            pltpu.VMEM((n_heads, S, d_k), jnp.bfloat16),   # projected k heads
            pltpu.VMEM((n_heads, S, d_k), jnp.bfloat16),   # projected v heads
        ],
        compiler_params=pltpu.CompilerParams(
            dimension_semantics=("parallel", "arbitrary"),
            vmem_limit_bytes=_vmem_limit_bytes()),
    )(q.astype(jnp.float32), k.astype(jnp.float32), v.astype(jnp.float32),
      wq_t, wk_t, wv_t, bq2, bk2, bv2)

    if return_attn:
        return results[0], results[1]
    return results[0]


def ref_multi_head_attention(q, k, v, params, n_heads):
    """Pure-JAX f32 reference mirroring the PyTorch forward (mask=None, kq_same=False)."""
    wq, bq, wk, bk, wv, bv = params
    B, S, D = q.shape
    d_k = D // n_heads

    def split(x):
        return x.reshape(B, S, n_heads, d_k).transpose(0, 2, 1, 3)

    qh = split(q @ wq.T + bq)
    kh = split(k @ wk.T + bk)
    vh = split(v @ wv.T + bv)
    scores = jnp.einsum('bhqd,bhkd->bhqk', qh, kh) / (d_k ** 0.5)
    scores = scores - scores.max()                       # global max, as in reference
    p = jax.nn.softmax(scores, axis=-1)
    out = jnp.einsum('bhqk,bhkd->bhqd', p, vh)
    out = out.transpose(0, 2, 1, 3).reshape(B, S, D)
    return out, p


if __name__ == "__main__":
    # Small shapes consistent with the module: batch=2, seq=8, d_model=32, heads=4.
    B, S, d_model, n_heads = 2, 8, 32, 4

    key = jax.random.PRNGKey(0)
    keys = jax.random.split(key, 9)
    bound = 1.0 / (d_model ** 0.5)  # PyTorch Linear default init range

    def uni(kk, shape):
        return jax.random.uniform(kk, shape, jnp.float32, -bound, bound)

    wq, bq = uni(keys[0], (d_model, d_model)), uni(keys[1], (d_model,))
    wk, bk = uni(keys[2], (d_model, d_model)), uni(keys[3], (d_model,))
    wv, bv = uni(keys[4], (d_model, d_model)), uni(keys[5], (d_model,))
    params = (wq, bq, wk, bk, wv, bv)

    q = jax.random.normal(keys[6], (B, S, d_model), jnp.float32)
    k = jax.random.normal(keys[7], (B, S, d_model), jnp.float32)
    v = jax.random.normal(keys[8], (B, S, d_model), jnp.float32)

    out, attn = multi_head_attention(q, k, v, params, n_heads)
    jax.block_until_ready((out, attn))

    # Fast path: skip computing/storing the attention-probability output.
    out_only = multi_head_attention(q, k, v, params, n_heads, return_attn=False)
    jax.block_until_ready(out_only)

    out_ref, attn_ref = ref_multi_head_attention(q, k, v, params, n_heads)
    assert out.shape == (B, S, d_model) and attn.shape == (B, n_heads, S, S)
    # bf16 MXU operands + bf16 attention writeback + approx reciprocal => loosen the
    # f32-reference tolerances (expected error ~1e-2 relative).
    assert jnp.allclose(out, out_ref, atol=3e-2, rtol=3e-2)
    assert jnp.allclose(attn.astype(jnp.float32), attn_ref, atol=3e-2, rtol=3e-2)
    assert jnp.allclose(out_only, out, atol=1e-5, rtol=1e-5)

    print("KERNEL_OK")
</pallas_src>

<mosaic_0001>
module attributes {stable_mosaic.version = 11 : i64} {
  func.func @mha_kernel(%arg0: i32, %arg1: i32, %arg2: memref<1x8x32xf32, #tpu.memory_space<vmem>>, %arg3: memref<1x8x32xf32, #tpu.memory_space<vmem>>, %arg4: memref<1x8x32xf32, #tpu.memory_space<vmem>>, %arg5: memref<32x32xbf16, #tpu.memory_space<vmem>>, %arg6: memref<32x32xbf16, #tpu.memory_space<vmem>>, %arg7: memref<32x32xbf16, #tpu.memory_space<vmem>>, %arg8: memref<1x32xf32, #tpu.memory_space<vmem>>, %arg9: memref<1x32xf32, #tpu.memory_space<vmem>>, %arg10: memref<1x32xf32, #tpu.memory_space<vmem>>, %arg11: memref<1x8x32xf32, #tpu.memory_space<vmem>>, %arg12: memref<1x1x8x8xbf16, #tpu.memory_space<vmem>>, %arg13: memref<4x8x8xbf16, #tpu.memory_space<vmem>>, %arg14: memref<4x8x8xbf16, #tpu.memory_space<vmem>>, %arg15: memref<4x8x8xbf16, #tpu.memory_space<vmem>>) attributes {dimension_semantics = [#tpu.dimension_semantics<parallel>, #tpu.dimension_semantics<arbitrary>], iteration_bounds = array<i64: 2, 4>, scalar_prefetch = 0 : i64, scratch_operands = 3 : i64, tpu.core_type = #tpu.core_type<tc>, window_params = [{transform_indices = @transform_0, window_bounds = array<i64: 1, 8, 32>}, {transform_indices = @transform_1, window_bounds = array<i64: 1, 8, 32>}, {transform_indices = @transform_2, window_bounds = array<i64: 1, 8, 32>}, {pipeline_mode = #tpu.pipeline_mode<synchronous>, transform_indices = @transform_3, window_bounds = array<i64: 32, 32>}, {pipeline_mode = #tpu.pipeline_mode<synchronous>, transform_indices = @transform_4, window_bounds = array<i64: 32, 32>}, {pipeline_mode = #tpu.pipeline_mode<synchronous>, transform_indices = @transform_5, window_bounds = array<i64: 32, 32>}, {pipeline_mode = #tpu.pipeline_mode<synchronous>, transform_indices = @transform_6, window_bounds = array<i64: 1, 32>}, {pipeline_mode = #tpu.pipeline_mode<synchronous>, transform_indices = @transform_7, window_bounds = array<i64: 1, 32>}, {pipeline_mode = #tpu.pipeline_mode<synchronous>, transform_indices = @transform_8, window_bounds = array<i64: 1, 32>}, {transform_indices = @transform_9, window_bounds = array<i64: 1, 8, 32>}, {transform_indices = @transform_10, window_bounds = array<i64: 1, 1, 8, 8>}]} {
    %c0_i32 = arith.constant 0 : i32
    %0 = arith.cmpi eq, %arg1, %c0_i32 : i32
    %1 = arith.extui %0 : i1 to i32
    %c0_i32_0 = arith.constant 0 : i32
    %2 = arith.cmpi ne, %1, %c0_i32_0 : i32
    scf.if %2 {
      %c0_18 = arith.constant 0 : index
      %c0_19 = arith.constant 0 : index
      %c0_20 = arith.constant 0 : index
      %40 = vector.load %arg2[%c0_18, %c0_19, %c0_20] : memref<1x8x32xf32, #tpu.memory_space<vmem>>, vector<1x8x32xf32>
      %41 = vector.shape_cast %40 : vector<1x8x32xf32> to vector<8x32xf32>
      %42 = arith.truncf %41 : vector<8x32xf32> to vector<8x32xbf16>
      %c0_21 = arith.constant 0 : index
      %c0_22 = arith.constant 0 : index
      %43 = vector.load %arg5[%c0_21, %c0_22] : memref<32x32xbf16, #tpu.memory_space<vmem>>, vector<32x32xbf16>
      %cst_23 = arith.constant dense<0.000000e+00> : vector<8x32xf32>
      %44 = tpu.matmul %42, %43, %cst_23 {dimension_numbers = #tpu.dot_dimension_numbers<[1], [0], [0], [1], [0, 0, 1, 1], [], []>} : vector<8x32xbf16>, vector<32x32xbf16>, vector<8x32xf32> -> vector<8x32xf32>
      %c0_24 = arith.constant 0 : index
      %c0_25 = arith.constant 0 : index
      %45 = vector.load %arg8[%c0_24, %c0_25] : memref<1x32xf32, #tpu.memory_space<vmem>>, vector<1x32xf32>
      %46 = vector.broadcast %45 : vector<1x32xf32> to vector<8x32xf32>
      %47 = arith.addf %44, %46 : vector<8x32xf32>
      %c0_26 = arith.constant 0 : index
      %c0_27 = arith.constant 0 : index
      %c0_28 = arith.constant 0 : index
      %48 = vector.load %arg3[%c0_26, %c0_27, %c0_28] : memref<1x8x32xf32, #tpu.memory_space<vmem>>, vector<1x8x32xf32>
      %49 = vector.shape_cast %48 : vector<1x8x32xf32> to vector<8x32xf32>
      %50 = arith.truncf %49 : vector<8x32xf32> to vector<8x32xbf16>
      %c0_29 = arith.constant 0 : index
      %c0_30 = arith.constant 0 : index
      %51 = vector.load %arg6[%c0_29, %c0_30] : memref<32x32xbf16, #tpu.memory_space<vmem>>, vector<32x32xbf16>
      %cst_31 = arith.constant dense<0.000000e+00> : vector<8x32xf32>
      %52 = tpu.matmul %50, %51, %cst_31 {dimension_numbers = #tpu.dot_dimension_numbers<[1], [0], [0], [1], [0, 0, 1, 1], [], []>} : vector<8x32xbf16>, vector<32x32xbf16>, vector<8x32xf32> -> vector<8x32xf32>
      %c0_32 = arith.constant 0 : index
      %c0_33 = arith.constant 0 : index
      %53 = vector.load %arg9[%c0_32, %c0_33] : memref<1x32xf32, #tpu.memory_space<vmem>>, vector<1x32xf32>
      %54 = vector.broadcast %53 : vector<1x32xf32> to vector<8x32xf32>
      %55 = arith.addf %52, %54 : vector<8x32xf32>
      %c0_34 = arith.constant 0 : index
      %c0_35 = arith.constant 0 : index
      %c0_36 = arith.constant 0 : index
      %56 = vector.load %arg4[%c0_34, %c0_35, %c0_36] : memref<1x8x32xf32, #tpu.memory_space<vmem>>, vector<1x8x32xf32>
      %57 = vector.shape_cast %56 : vector<1x8x32xf32> to vector<8x32xf32>
      %58 = arith.truncf %57 : vector<8x32xf32> to vector<8x32xbf16>
      %c0_37 = arith.constant 0 : index
      %c0_38 = arith.constant 0 : index
      %59 = vector.load %arg7[%c0_37, %c0_38] : memref<32x32xbf16, #tpu.memory_space<vmem>>, vector<32x32xbf16>
      %cst_39 = arith.constant dense<0.000000e+00> : vector<8x32xf32>
      %60 = tpu.matmul %58, %59, %cst_39 {dimension_numbers = #tpu.dot_dimension_numbers<[1], [0], [0], [1], [0, 0, 1, 1], [], []>} : vector<8x32xbf16>, vector<32x32xbf16>, vector<8x32xf32> -> vector<8x32xf32>
      %c0_40 = arith.constant 0 : index
      %c0_41 = arith.constant 0 : index
      %61 = vector.load %arg10[%c0_40, %c0_41] : memref<1x32xf32, #tpu.memory_space<vmem>>, vector<1x32xf32>
      %62 = vector.broadcast %61 : vector<1x32xf32> to vector<8x32xf32>
      %63 = arith.addf %60, %62 : vector<8x32xf32>
      %64 = vector.extract_strided_slice %47 {offsets = [0, 0], sizes = [8, 8], strides = [1, 1]} : vector<8x32xf32> to vector<8x8xf32>
      %65 = arith.truncf %64 : vector<8x8xf32> to vector<8x8xbf16>
      %c0_42 = arith.constant 0 : index
      %c0_43 = arith.constant 0 : index
      %c0_44 = arith.constant 0 : index
      %66 = vector.load %arg13[%c0_42, %c0_43, %c0_44] : memref<4x8x8xbf16, #tpu.memory_space<vmem>>, vector<1x8x8xbf16>
      %67 = vector.shape_cast %66 : vector<1x8x8xbf16> to vector<8x8xbf16>
      %68 = vector.shape_cast %65 : vector<8x8xbf16> to vector<1x8x8xbf16>
      tpu.vector_store %arg13[%c0_42, %c0_43, %c0_44], %68 {strides = array<i32>} : memref<4x8x8xbf16, #tpu.memory_space<vmem>>, vector<1x8x8xbf16>,
      %69 = vector.extract_strided_slice %55 {offsets = [0, 0], sizes = [8, 8], strides = [1, 1]} : vector<8x32xf32> to vector<8x8xf32>
      %70 = arith.truncf %69 : vector<8x8xf32> to vector<8x8xbf16>
      %c0_45 = arith.constant 0 : index
      %c0_46 = arith.constant 0 : index
      %c0_47 = arith.constant 0 : index
      %71 = vector.load %arg14[%c0_45, %c0_46, %c0_47] : memref<4x8x8xbf16, #tpu.memory_space<vmem>>, vector<1x8x8xbf16>
      %72 = vector.shape_cast %71 : vector<1x8x8xbf16> to vector<8x8xbf16>
      %73 = vector.shape_cast %70 : vector<8x8xbf16> to vector<1x8x8xbf16>
      tpu.vector_store %arg14[%c0_45, %c0_46, %c0_47], %73 {strides = array<i32>} : memref<4x8x8xbf16, #tpu.memory_space<vmem>>, vector<1x8x8xbf16>,
      %74 = vector.extract_strided_slice %63 {offsets = [0, 0], sizes = [8, 8], strides = [1, 1]} : vector<8x32xf32> to vector<8x8xf32>
      %75 = arith.truncf %74 : vector<8x8xf32> to vector<8x8xbf16>
      %c0_48 = arith.constant 0 : index
      %c0_49 = arith.constant 0 : index
      %c0_50 = arith.constant 0 : index
      %76 = vector.load %arg15[%c0_48, %c0_49, %c0_50] : memref<4x8x8xbf16, #tpu.memory_space<vmem>>, vector<1x8x8xbf16>
      %77 = vector.shape_cast %76 : vector<1x8x8xbf16> to vector<8x8xbf16>
      %78 = vector.shape_cast %75 : vector<8x8xbf16> to vector<1x8x8xbf16>
      tpu.vector_store %arg15[%c0_48, %c0_49, %c0_50], %78 {strides = array<i32>} : memref<4x8x8xbf16, #tpu.memory_space<vmem>>, vector<1x8x8xbf16>,
      %79 = vector.extract_strided_slice %47 {offsets = [0, 8], sizes = [8, 8], strides = [1, 1]} : vector<8x32xf32> to vector<8x8xf32>
      %80 = arith.truncf %79 : vector<8x8xf32> to vector<8x8xbf16>
      %c1 = arith.constant 1 : index
      %c0_51 = arith.constant 0 : index
      %c0_52 = arith.constant 0 : index
      %81 = vector.load %arg13[%c1, %c0_51, %c0_52] : memref<4x8x8xbf16, #tpu.memory_space<vmem>>, vector<1x8x8xbf16>
      %82 = vector.shape_cast %81 : vector<1x8x8xbf16> to vector<8x8xbf16>
      %83 = vector.shape_cast %80 : vector<8x8xbf16> to vector<1x8x8xbf16>
      tpu.vector_store %arg13[%c1, %c0_51, %c0_52], %83 {strides = array<i32>} : memref<4x8x8xbf16, #tpu.memory_space<vmem>>, vector<1x8x8xbf16>,
      %84 = vector.extract_strided_slice %55 {offsets = [0, 8], sizes = [8, 8], strides = [1, 1]} : vector<8x32xf32> to vector<8x8xf32>
      %85 = arith.truncf %84 : vector<8x8xf32> to vector<8x8xbf16>
      %c1_53 = arith.constant 1 : index
      %c0_54 = arith.constant 0 : index
      %c0_55 = arith.constant 0 : index
      %86 = vector.load %arg14[%c1_53, %c0_54, %c0_55] : memref<4x8x8xbf16, #tpu.memory_space<vmem>>, vector<1x8x8xbf16>
      %87 = vector.shape_cast %86 : vector<1x8x8xbf16> to vector<8x8xbf16>
      %88 = vector.shape_cast %85 : vector<8x8xbf16> to vector<1x8x8xbf16>
      tpu.vector_store %arg14[%c1_53, %c0_54, %c0_55], %88 {strides = array<i32>} : memref<4x8x8xbf16, #tpu.memory_space<vmem>>, vector<1x8x8xbf16>,
      %89 = vector.extract_strided_slice %63 {offsets = [0, 8], sizes = [8, 8], strides = [1, 1]} : vector<8x32xf32> to vector<8x8xf32>
      %90 = arith.truncf %89 : vector<8x8xf32> to vector<8x8xbf16>
      %c1_56 = arith.constant 1 : index
      %c0_57 = arith.constant 0 : index
      %c0_58 = arith.constant 0 : index
      %91 = vector.load %arg15[%c1_56, %c0_57, %c0_58] : memref<4x8x8xbf16, #tpu.memory_space<vmem>>, vector<1x8x8xbf16>
      %92 = vector.shape_cast %91 : vector<1x8x8xbf16> to vector<8x8xbf16>
      %93 = vector.shape_cast %90 : vector<8x8xbf16> to vector<1x8x8xbf16>
      tpu.vector_store %arg15[%c1_56, %c0_57, %c0_58], %93 {strides = array<i32>} : memref<4x8x8xbf16, #tpu.memory_space<vmem>>, vector<1x8x8xbf16>,
      %94 = vector.extract_strided_slice %47 {offsets = [0, 16], sizes = [8, 8], strides = [1, 1]} : vector<8x32xf32> to vector<8x8xf32>
      %95 = arith.truncf %94 : vector<8x8xf32> to vector<8x8xbf16>
      %c2 = arith.constant 2 : index
      %c0_59 = arith.constant 0 : index
      %c0_60 = arith.constant 0 : index
      %96 = vector.load %arg13[%c2, %c0_59, %c0_60] : memref<4x8x8xbf16, #tpu.memory_space<vmem>>, vector<1x8x8xbf16>
      %97 = vector.shape_cast %96 : vector<1x8x8xbf16> to vector<8x8xbf16>
      %98 = vector.shape_cast %95 : vector<8x8xbf16> to vector<1x8x8xbf16>
      tpu.vector_store %arg13[%c2, %c0_59, %c0_60], %98 {strides = array<i32>} : memref<4x8x8xbf16, #tpu.memory_space<vmem>>, vector<1x8x8xbf16>,
      %99 = vector.extract_strided_slice %55 {offsets = [0, 16], sizes = [8, 8], strides = [1, 1]} : vector<8x32xf32> to vector<8x8xf32>
      %100 = arith.truncf %99 : vector<8x8xf32> to vector<8x8xbf16>
      %c2_61 = arith.constant 2 : index
      %c0_62 = arith.constant 0 : index
      %c0_63 = arith.constant 0 : index
      %101 = vector.load %arg14[%c2_61, %c0_62, %c0_63] : memref<4x8x8xbf16, #tpu.memory_space<vmem>>, vector<1x8x8xbf16>
      %102 = vector.shape_cast %101 : vector<1x8x8xbf16> to vector<8x8xbf16>
      %103 = vector.shape_cast %100 : vector<8x8xbf16> to vector<1x8x8xbf16>
      tpu.vector_store %arg14[%c2_61, %c0_62, %c0_63], %103 {strides = array<i32>} : memref<4x8x8xbf16, #tpu.memory_space<vmem>>, vector<1x8x8xbf16>,
      %104 = vector.extract_strided_slice %63 {offsets = [0, 16], sizes = [8, 8], strides = [1, 1]} : vector<8x32xf32> to vector<8x8xf32>
      %105 = arith.truncf %104 : vector<8x8xf32> to vector<8x8xbf16>
      %c2_64 = arith.constant 2 : index
      %c0_65 = arith.constant 0 : index
      %c0_66 = arith.constant 0 : index
      %106 = vector.load %arg15[%c2_64, %c0_65, %c0_66] : memref<4x8x8xbf16, #tpu.memory_space<vmem>>, vector<1x8x8xbf16>
      %107 = vector.shape_cast %106 : vector<1x8x8xbf16> to vector<8x8xbf16>
      %108 = vector.shape_cast %105 : vector<8x8xbf16> to vector<1x8x8xbf16>
      tpu.vector_store %arg15[%c2_64, %c0_65, %c0_66], %108 {strides = array<i32>} : memref<4x8x8xbf16, #tpu.memory_space<vmem>>, vector<1x8x8xbf16>,
      %109 = vector.extract_strided_slice %47 {offsets = [0, 24], sizes = [8, 8], strides = [1, 1]} : vector<8x32xf32> to vector<8x8xf32>
      %110 = arith.truncf %109 : vector<8x8xf32> to vector<8x8xbf16>
      %c3 = arith.constant 3 : index
      %c0_67 = arith.constant 0 : index
      %c0_68 = arith.constant 0 : index
      %111 = vector.load %arg13[%c3, %c0_67, %c0_68] : memref<4x8x8xbf16, #tpu.memory_space<vmem>>, vector<1x8x8xbf16>
      %112 = vector.shape_cast %111 : vector<1x8x8xbf16> to vector<8x8xbf16>
      %113 = vector.shape_cast %110 : vector<8x8xbf16> to vector<1x8x8xbf16>
      tpu.vector_store %arg13[%c3, %c0_67, %c0_68], %113 {strides = array<i32>} : memref<4x8x8xbf16, #tpu.memory_space<vmem>>, vector<1x8x8xbf16>,
      %114 = vector.extract_strided_slice %55 {offsets = [0, 24], sizes = [8, 8], strides = [1, 1]} : vector<8x32xf32> to vector<8x8xf32>
      %115 = arith.truncf %114 : vector<8x8xf32> to vector<8x8xbf16>
      %c3_69 = arith.constant 3 : index
      %c0_70 = arith.constant 0 : index
      %c0_71 = arith.constant 0 : index
      %116 = vector.load %arg14[%c3_69, %c0_70, %c0_71] : memref<4x8x8xbf16, #tpu.memory_space<vmem>>, vector<1x8x8xbf16>
      %117 = vector.shape_cast %116 : vector<1x8x8xbf16> to vector<8x8xbf16>
      %118 = vector.shape_cast %115 : vector<8x8xbf16> to vector<1x8x8xbf16>
      tpu.vector_store %arg14[%c3_69, %c0_70, %c0_71], %118 {strides = array<i32>} : memref<4x8x8xbf16, #tpu.memory_space<vmem>>, vector<1x8x8xbf16>,
      %119 = vector.extract_strided_slice %63 {offsets = [0, 24], sizes = [8, 8], strides = [1, 1]} : vector<8x32xf32> to vector<8x8xf32>
      %120 = arith.truncf %119 : vector<8x8xf32> to vector<8x8xbf16>
      %c3_72 = arith.constant 3 : index
      %c0_73 = arith.constant 0 : index
      %c0_74 = arith.constant 0 : index
      %121 = vector.load %arg15[%c3_72, %c0_73, %c0_74] : memref<4x8x8xbf16, #tpu.memory_space<vmem>>, vector<1x8x8xbf16>
      %122 = vector.shape_cast %121 : vector<1x8x8xbf16> to vector<8x8xbf16>
      %123 = vector.shape_cast %120 : vector<8x8xbf16> to vector<1x8x8xbf16>
      tpu.vector_store %arg15[%c3_72, %c0_73, %c0_74], %123 {strides = array<i32>} : memref<4x8x8xbf16, #tpu.memory_space<vmem>>, vector<1x8x8xbf16>,
    } else {
    }
    %3 = arith.index_cast %arg1 : i32 to index
    %c0 = arith.constant 0 : index
    %c0_1 = arith.constant 0 : index
    %4 = vector.load %arg13[%3, %c0, %c0_1] : memref<4x8x8xbf16, #tpu.memory_space<vmem>>, vector<1x8x8xbf16>
    %5 = vector.shape_cast %4 : vector<1x8x8xbf16> to vector<8x8xbf16>
    %6 = arith.index_cast %arg1 : i32 to index
    %c0_2 = arith.constant 0 : index
    %c0_3 = arith.constant 0 : index
    %7 = vector.load %arg14[%6, %c0_2, %c0_3] : memref<4x8x8xbf16, #tpu.memory_space<vmem>>, vector<1x8x8xbf16>
    %8 = vector.shape_cast %7 : vector<1x8x8xbf16> to vector<8x8xbf16>
    %9 = arith.index_cast %arg1 : i32 to index
    %c0_4 = arith.constant 0 : index
    %c0_5 = arith.constant 0 : index
    %10 = vector.load %arg15[%9, %c0_4, %c0_5] : memref<4x8x8xbf16, #tpu.memory_space<vmem>>, vector<1x8x8xbf16>
    %11 = vector.shape_cast %10 : vector<1x8x8xbf16> to vector<8x8xbf16>
    %cst = arith.constant dense<0.000000e+00> : vector<8x8xf32>
    %12 = tpu.matmul %5, %8, %cst {dimension_numbers = #tpu.dot_dimension_numbers<[1], [1], [0], [0], [0, 0, 1, 0], [], []>} : vector<8x8xbf16>, vector<8x8xbf16>, vector<8x8xf32> -> vector<8x8xf32>
    %cst_6 = arith.constant dense<0xFF800000> : vector<8xf32>
    %13 = vector.multi_reduction <maximumf>, %12, %cst_6 [1] : vector<8x8xf32> to vector<8xf32>
    %14 = vector.shape_cast %13 : vector<8xf32> to vector<8x1xf32>
    %15 = vector.broadcast %14 : vector<8x1xf32> to vector<8x8xf32>
    %16 = arith.subf %12, %15 : vector<8x8xf32>
    %17 = math.exp %16 : vector<8x8xf32>
    %cst_7 = arith.constant dense<0.000000e+00> : vector<8xf32>
    %18 = vector.multi_reduction <add>, %17, %cst_7 [1] : vector<8x8xf32> to vector<8xf32>
    %19 = vector.shape_cast %18 : vector<8xf32> to vector<8x1xf32>
    %20 = tpu.reciprocal %19 {approx = true} : vector<8x1xf32> -> vector<8x1xf32>
    %21 = vector.broadcast %20 : vector<8x1xf32> to vector<8x8xf32>
    %22 = arith.mulf %17, %21 : vector<8x8xf32>
    %23 = arith.truncf %22 : vector<8x8xf32> to vector<8x8xbf16>
    %cst_8 = arith.constant dense<0.000000e+00> : vector<8x8xf32>
    %24 = tpu.matmul %23, %11, %cst_8 {dimension_numbers = #tpu.dot_dimension_numbers<[1], [0], [0], [1], [0, 0, 1, 1], [], []>} : vector<8x8xbf16>, vector<8x8xbf16>, vector<8x8xf32> -> vector<8x8xf32>
    %c0_i32_9 = arith.constant 0 : i32
    %25 = arith.cmpi eq, %arg1, %c0_i32_9 : i32
    %26 = arith.extui %25 : i1 to i32
    %c0_i32_10 = arith.constant 0 : i32
    %27 = arith.cmpi ne, %26, %c0_i32_10 : i32
    scf.if %27 {
      %c0_18 = arith.constant 0 : index
      %c0_19 = arith.constant 0 : index
      %c0_20 = arith.constant 0 : index
      %40 = vector.load %arg11[%c0_18, %c0_19, %c0_20] : memref<1x8x32xf32, #tpu.memory_space<vmem>>, vector<1x8x8xf32>
      %41 = vector.shape_cast %40 : vector<1x8x8xf32> to vector<8x8xf32>
      %42 = vector.shape_cast %24 : vector<8x8xf32> to vector<1x8x8xf32>
      tpu.vector_store %arg11[%c0_18, %c0_19, %c0_20], %42 {strides = array<i32>} : memref<1x8x32xf32, #tpu.memory_space<vmem>>, vector<1x8x8xf32>,
    } else {
    }
    %c1_i32 = arith.constant 1 : i32
    %28 = arith.cmpi eq, %arg1, %c1_i32 : i32
    %29 = arith.extui %28 : i1 to i32
    %c0_i32_11 = arith.constant 0 : i32
    %30 = arith.cmpi ne, %29, %c0_i32_11 : i32
    scf.if %30 {
      %c0_18 = arith.constant 0 : index
      %c0_19 = arith.constant 0 : index
      %c8 = arith.constant 8 : index
      %40 = vector.load %arg11[%c0_18, %c0_19, %c8] : memref<1x8x32xf32, #tpu.memory_space<vmem>>, vector<1x8x8xf32>
      %41 = vector.shape_cast %40 : vector<1x8x8xf32> to vector<8x8xf32>
      %42 = vector.shape_cast %24 : vector<8x8xf32> to vector<1x8x8xf32>
      tpu.vector_store %arg11[%c0_18, %c0_19, %c8], %42 {strides = array<i32>} : memref<1x8x32xf32, #tpu.memory_space<vmem>>, vector<1x8x8xf32>,
    } else {
    }
    %c2_i32 = arith.constant 2 : i32
    %31 = arith.cmpi eq, %arg1, %c2_i32 : i32
    %32 = arith.extui %31 : i1 to i32
    %c0_i32_12 = arith.constant 0 : i32
    %33 = arith.cmpi ne, %32, %c0_i32_12 : i32
    scf.if %33 {
      %c0_18 = arith.constant 0 : index
      %c0_19 = arith.constant 0 : index
      %c16 = arith.constant 16 : index
      %40 = vector.load %arg11[%c0_18, %c0_19, %c16] : memref<1x8x32xf32, #tpu.memory_space<vmem>>, vector<1x8x8xf32>
      %41 = vector.shape_cast %40 : vector<1x8x8xf32> to vector<8x8xf32>
      %42 = vector.shape_cast %24 : vector<8x8xf32> to vector<1x8x8xf32>
      tpu.vector_store %arg11[%c0_18, %c0_19, %c16], %42 {strides = array<i32>} : memref<1x8x32xf32, #tpu.memory_space<vmem>>, vector<1x8x8xf32>,
    } else {
    }
    %c3_i32 = arith.constant 3 : i32
    %34 = arith.cmpi eq, %arg1, %c3_i32 : i32
    %35 = arith.extui %34 : i1 to i32
    %c0_i32_13 = arith.constant 0 : i32
    %36 = arith.cmpi ne, %35, %c0_i32_13 : i32
    scf.if %36 {
      %c0_18 = arith.constant 0 : index
      %c0_19 = arith.constant 0 : index
      %c24 = arith.constant 24 : index
      %40 = vector.load %arg11[%c0_18, %c0_19, %c24] : memref<1x8x32xf32, #tpu.memory_space<vmem>>, vector<1x8x8xf32>
      %41 = vector.shape_cast %40 : vector<1x8x8xf32> to vector<8x8xf32>
      %42 = vector.shape_cast %24 : vector<8x8xf32> to vector<1x8x8xf32>
      tpu.vector_store %arg11[%c0_18, %c0_19, %c24], %42 {strides = array<i32>} : memref<1x8x32xf32, #tpu.memory_space<vmem>>, vector<1x8x8xf32>,
    } else {
    }
    %c0_14 = arith.constant 0 : index
    %c0_15 = arith.constant 0 : index
    %c0_16 = arith.constant 0 : index
    %c0_17 = arith.constant 0 : index
    %37 = vector.load %arg12[%c0_14, %c0_15, %c0_16, %c0_17] : memref<1x1x8x8xbf16, #tpu.memory_space<vmem>>, vector<1x1x8x8xbf16>
    %38 = vector.shape_cast %37 : vector<1x1x8x8xbf16> to vector<8x8xbf16>
    %39 = vector.shape_cast %23 : vector<8x8xbf16> to vector<1x1x8x8xbf16>
    tpu.vector_store %arg12[%c0_14, %c0_15, %c0_16, %c0_17], %39 {strides = array<i32>} : memref<1x1x8x8xbf16, #tpu.memory_space<vmem>>, vector<1x1x8x8xbf16>,
    return
  }
  func.func @transform_0(%arg0: i32, %arg1: i32) -> (i32, i32, i32) {
    %c0_i32 = arith.constant 0 : i32
    %c0_i32_0 = arith.constant 0 : i32
    %c0_i32_1 = arith.constant 0 : i32
    return %arg0, %c0_i32, %c0_i32_0 : i32, i32, i32
  }
  func.func @transform_1(%arg0: i32, %arg1: i32) -> (i32, i32, i32) {
    %c0_i32 = arith.constant 0 : i32
    %c0_i32_0 = arith.constant 0 : i32
    %c0_i32_1 = arith.constant 0 : i32
    return %arg0, %c0_i32, %c0_i32_0 : i32, i32, i32
  }
  func.func @transform_2(%arg0: i32, %arg1: i32) -> (i32, i32, i32) {
    %c0_i32 = arith.constant 0 : i32
    %c0_i32_0 = arith.constant 0 : i32
    %c0_i32_1 = arith.constant 0 : i32
    return %arg0, %c0_i32, %c0_i32_0 : i32, i32, i32
  }
  func.func @transform_3(%arg0: i32, %arg1: i32) -> (i32, i32) {
    %c0_i32 = arith.constant 0 : i32
    %c0_i32_0 = arith.constant 0 : i32
    %c0_i32_1 = arith.constant 0 : i32
    return %c0_i32, %c0_i32_0 : i32, i32
  }
  func.func @transform_4(%arg0: i32, %arg1: i32) -> (i32, i32) {
    %c0_i32 = arith.constant 0 : i32
    %c0_i32_0 = arith.constant 0 : i32
    %c0_i32_1 = arith.constant 0 : i32
    return %c0_i32, %c0_i32_0 : i32, i32
  }
  func.func @transform_5(%arg0: i32, %arg1: i32) -> (i32, i32) {
    %c0_i32 = arith.constant 0 : i32
    %c0_i32_0 = arith.constant 0 : i32
    %c0_i32_1 = arith.constant 0 : i32
    return %c0_i32, %c0_i32_0 : i32, i32
  }
  func.func @transform_6(%arg0: i32, %arg1: i32) -> (i32, i32) {
    %c0_i32 = arith.constant 0 : i32
    %c0_i32_0 = arith.constant 0 : i32
    %c0_i32_1 = arith.constant 0 : i32
    return %c0_i32, %c0_i32_0 : i32, i32
  }
  func.func @transform_7(%arg0: i32, %arg1: i32) -> (i32, i32) {
    %c0_i32 = arith.constant 0 : i32
    %c0_i32_0 = arith.constant 0 : i32
    %c0_i32_1 = arith.constant 0 : i32
    return %c0_i32, %c0_i32_0 : i32, i32
  }
  func.func @transform_8(%arg0: i32, %arg1: i32) -> (i32, i32) {
    %c0_i32 = arith.constant 0 : i32
    %c0_i32_0 = arith.constant 0 : i32
    %c0_i32_1 = arith.constant 0 : i32
    return %c0_i32, %c0_i32_0 : i32, i32
  }
  func.func @transform_9(%arg0: i32, %arg1: i32) -> (i32, i32, i32) {
    %c0_i32 = arith.constant 0 : i32
    %c0_i32_0 = arith.constant 0 : i32
    %c0_i32_1 = arith.constant 0 : i32
    return %arg0, %c0_i32, %c0_i32_0 : i32, i32, i32
  }
  func.func @transform_10(%arg0: i32, %arg1: i32) -> (i32, i32, i32, i32) {
    %c0_i32 = arith.constant 0 : i32
    %c0_i32_0 = arith.constant 0 : i32
    %c0_i32_1 = arith.constant 0 : i32
    return %arg0, %arg1, %c0_i32, %c0_i32_0 : i32, i32, i32, i32
  }
}

</mosaic_0001>

<llo_original>
// kernel: tpu_custom_call.1
$region0: #{tpu_custom_call.1}
  #allocation0 [shape = 'u32[]', space=smem, size = 0x4, offset = 0x4, fixed_abs, tag = 'smem constant byte address 0x4 - core index']
  #allocation1 [shape = 'u32[144,128]{1,0:T(1,128)}', space=vmem, size = 0x12000, scoped, tag = 'internal scratch']
  #allocation2 [shape = 'bf16[4,8,8]{2,1,0:T(8,128)(2,1)}', space=vmem, size = 0x2000, scoped, tag = 'scratch operand']
  #allocation3 [shape = 'bf16[4,8,8]{2,1,0:T(8,128)(2,1)}', space=vmem, size = 0x2000, scoped, tag = 'scratch operand']
  #allocation4 [shape = 'bf16[4,8,8]{2,1,0:T(8,128)(2,1)}', space=vmem, size = 0x2000, scoped, tag = 'scratch operand']
  %s0 = inlined_call_operand.hbm [shape: f32[2,8,32], index: 0, kind: input, shape index: {}]
  %s1 = inlined_call_operand.hbm [shape: f32[2,8,32], index: 1, kind: input, shape index: {}]
  %s2 = inlined_call_operand.hbm [shape: f32[2,8,32], index: 2, kind: input, shape index: {}]
  %s3 = inlined_call_operand.hbm [shape: bf16[32,32], index: 3, kind: input, shape index: {}]
  %s4 = inlined_call_operand.hbm [shape: bf16[32,32], index: 4, kind: input, shape index: {}]
  %s5 = inlined_call_operand.vmem [shape: bf16[32,32], index: 5, kind: input, shape index: {}]
  %s6 = inlined_call_operand.vmem [shape: f32[1,32], index: 6, kind: input, shape index: {}]
  %s7 = inlined_call_operand.vmem [shape: f32[1,32], index: 7, kind: input, shape index: {}]
  %s8 = inlined_call_operand.vmem [shape: f32[1,32], index: 8, kind: input, shape index: {}]
  %s9 = inlined_call_operand.hbm [shape: f32[2,8,32], index: 9, kind: output, shape index: {0}]
  %s10 = inlined_call_operand.hbm [shape: bf16[2,4,8,8], index: 10, kind: output, shape index: {1}]
  %11 = xla_tuple %s9, %s10
  %s12 = sld [smem:[#allocation0]]
  $region117: #{tpu_custom_call.1} parent=0
    _
  %s14 = ssub.s32 1, %s12
  %s15 = scalar_select 0, %s14, %s12
  $region1: #{tpu_custom_call.1} parent=0
    #allocation5 [shape = 'u8[8192]{0}', space=vmem, size = 0x2000, scoped, tag = 'input window, operand 0']
    #allocation6 [shape = 's32[2]{0}', space=sflag, size = 0x8, scoped, tag = 'scoped memory for tpu_custom_call.1']
    #allocation7 [shape = 's32[2]{0}', space=sflag, size = 0x8, scoped, tag = 'scoped memory for tpu_custom_call.1']
    #allocation8 [shape = 'u8[8192]{0}', space=vmem, size = 0x2000, scoped, tag = 'input window, operand 1']
    #allocation9 [shape = 's32[2]{0}', space=sflag, size = 0x8, scoped, tag = 'scoped memory for tpu_custom_call.1']
    #allocation10 [shape = 'u8[8192]{0}', space=vmem, size = 0x2000, scoped, tag = 'input window, operand 2']
    #allocation11 [shape = 'u8[8192]{0}', space=vmem, size = 0x2000, scoped, tag = 'input window, operand 3, single buffered']
    #allocation12 [shape = 's32[1]{0}', space=sflag, size = 0x4, scoped, tag = 'scoped memory for tpu_custom_call.1']
    #allocation13 [shape = 'u8[8192]{0}', space=vmem, size = 0x2000, scoped, tag = 'input window, operand 4, single buffered']
    #allocation14 [shape = 'u8[8192]{0}', space=vmem, size = 0x2000, scoped, tag = 'output window, operand 0']
    #allocation15 [shape = 'u8[4096]{0}', space=vmem, size = 0x1000, scoped, tag = 'output window, operand 1']
    #allocation16 [shape = 's32[2]{0}', space=sflag, size = 0x8, scoped, tag = 'scoped memory for tpu_custom_call.1']
    %16 = vsyncpa [#allocation6], 0
    %s17 = scalar_lea.sflag [#allocation6], 1
    %18 = vsyncpa %s17, 0
    %19 = vsyncpa [#allocation9], 0
    %s20 = scalar_lea.sflag [#allocation9], 1
    %21 = vsyncpa %s20, 0
    %22 = vsyncpa [#allocation12], 0
    %23 = vsyncpa [#allocation7], 0
    %s24 = scalar_lea.sflag [#allocation7], 1
    %25 = vsyncpa %s24, 0
    %26 = vsyncpa [#allocation16], 0
    %s27 = scalar_lea.sflag [#allocation16], 1
    %28 = vsyncpa %s27, 0
    loop: start=0, step=1, limit=10
    $region2: #{tpu_custom_call.1} parent=1 // loop_pre_header
      _
    $region3: #{tpu_custom_call.1} parent=1 // loop_header
      %s30 = sphi 0, %s34
      %p31 = scmp.ge.s32.totalorder %s30, 10
      %s37 = sphi 0, %s49
      %s38 = sphi 0, %s45
      %s39 = sphi 0, %s37
      %s40 = sphi 0, %s38
      %s41 = sphi 0, %s39
      %s42 = sphi 0, %s40
      %s52 = sphi 0, %s54
      %s55 = sphi 0, %s52
      %s56 = sphi 0, %s55
      %s72 = sphi 0, %s56
      %s78 = sphi 0, %s80
      %s81 = sphi 0, %s78
      %s82 = sphi 0, %s81
      %s98 = sphi 0, %s82
      %s104 = sphi 0, %s106
      %s107 = sphi 0, %s104
      %s108 = sphi 0, %s107
      %s124 = sphi 0, %s108
      %s128 = sphi 0, %s128
      %s130 = sphi 0, %s128
      %s131 = sphi 0, %s130
      %s145 = sphi 0, %s131
      %s149 = sphi 0, %s149
      %s151 = sphi 0, %s149
      %s152 = sphi 0, %s151
      %s166 = sphi 0, %s152
      %s170 = sphi 0, %s170
      %s172 = sphi 0, %s170
      %s173 = sphi 0, %s172
      %s187 = sphi 0, %s173
      %s191 = sphi 0, %s191
      %s193 = sphi 0, %s191
      %s194 = sphi 0, %s193
      %s208 = sphi 0, %s194
      %s212 = sphi 0, %s212
      %s214 = sphi 0, %s212
      %s215 = sphi 0, %s214
      %s229 = sphi 0, %s215
      %s233 = sphi 0, %s233
      %s235 = sphi 0, %s233
      %s236 = sphi 0, %s235
      %s250 = sphi 0, %s236
      %s256 = sphi 0, %s258
      %s259 = sphi 0, %s256
      %s260 = sphi 0, %s259
      %s276 = sphi 0, %s260
      %s284 = sphi 0, %s286
      %s287 = sphi 0, %s284
      %s288 = sphi 0, %s287
      %s304 = sphi 0, %s288
    $region4: #{tpu_custom_call.1} parent=1 // loop_header_branch
      %33 = sbr.rel (%p31) target = $region8
    $region5: #{tpu_custom_call.1} parent=1 // loop_body
      %s35 = ssub.s32 %s30, 1
      %s36 = ssub.s32 %s30, 2
      %s43 = sadd.s32 1, %s38
      %p44 = scmp.ge.s32.totalorder %s43, 4
      %s45 = scalar_select %p44, 0, %s43
      %s46 = sadd.s32 1, %s37
      %s47 = scalar_select %p44, %s46, %s37
      %p48 = scmp.ge.s32.totalorder %s47, 2
      %s49 = scalar_select %p48, 0, %s47
      %s50 = ssub.s32 %s37, %s49
      %p51 = scmp.eq.s32.totalorder %s50, 0
      %s53 = sadd.s32 %s52, 1
      %s54 = scalar_select %p51, %s52, %s53
      %p57 = pneg %p51
      %p58 = scmp.eq.s32.totalorder %s30, 7
      %p59 = por %p57, %p58
      %p60 = scmp.ne.s32.totalorder %s52, %s55
      %p61 = scmp.eq.s32.totalorder %s30, 0
      %p62 = por %p60, %p61
      %p63 = scmp.ne.s32.totalorder %s52, %s55
      %p64 = scmp.eq.s32.totalorder %s35, 7
      %p65 = por %p63, %p64
      %p66 = scmp.ne.s32.totalorder %s55, %s56
      %p67 = scmp.eq.s32.totalorder %s35, 0
      %p68 = por %p66, %p67
      %p69 = scmp.ne.s32.totalorder %s55, %s56
      %p70 = scmp.eq.s32.totalorder %s36, 7
      %p71 = por %p69, %p70
      %p73 = scmp.ne.s32.totalorder %s56, %s72
      %p74 = scmp.eq.s32.totalorder %s36, 0
      %p75 = por %p73, %p74
      %s76 = ssub.s32 %s37, %s49
      %p77 = scmp.eq.s32.totalorder %s76, 0
      %s79 = sadd.s32 %s78, 1
      %s80 = scalar_select %p77, %s78, %s79
      %p83 = pneg %p77
      %p84 = scmp.eq.s32.totalorder %s30, 7
      %p85 = por %p83, %p84
      %p86 = scmp.ne.s32.totalorder %s78, %s81
      %p87 = scmp.eq.s32.totalorder %s30, 0
      %p88 = por %p86, %p87
      %p89 = scmp.ne.s32.totalorder %s78, %s81
      %p90 = scmp.eq.s32.totalorder %s35, 7
      %p91 = por %p89, %p90
      %p92 = scmp.ne.s32.totalorder %s81, %s82
      %p93 = scmp.eq.s32.totalorder %s35, 0
      %p94 = por %p92, %p93
      %p95 = scmp.ne.s32.totalorder %s81, %s82
      %p96 = scmp.eq.s32.totalorder %s36, 7
      %p97 = por %p95, %p96
      %p99 = scmp.ne.s32.totalorder %s82, %s98
      %p100 = scmp.eq.s32.totalorder %s36, 0
      %p101 = por %p99, %p100
      %s102 = ssub.s32 %s37, %s49
      %p103 = scmp.eq.s32.totalorder %s102, 0
      %s105 = sadd.s32 %s104, 1
      %s106 = scalar_select %p103, %s104, %s105
      %p109 = pneg %p103
      %p110 = scmp.eq.s32.totalorder %s30, 7
      %p111 = por %p109, %p110
      %p112 = scmp.ne.s32.totalorder %s104, %s107
      %p113 = scmp.eq.s32.totalorder %s30, 0
      %p114 = por %p112, %p113
      %p115 = scmp.ne.s32.totalorder %s104, %s107
      %p116 = scmp.eq.s32.totalorder %s35, 7
      %p117 = por %p115, %p116
      %p118 = scmp.ne.s32.totalorder %s107, %s108
      %p119 = scmp.eq.s32.totalorder %s35, 0
      %p120 = por %p118, %p119
      %p121 = scmp.ne.s32.totalorder %s107, %s108
      %p122 = scmp.eq.s32.totalorder %s36, 7
      %p123 = por %p121, %p122
      %p125 = scmp.ne.s32.totalorder %s108, %s124
      %p126 = scmp.eq.s32.totalorder %s36, 0
      %p127 = por %p125, %p126
      %s129 = sadd.s32 %s128, 1
      %p132 = scmp.eq.s32.totalorder %s30, 7
      %p133 = scmp.ne.s32.totalorder %s128, %s130
      %p134 = scmp.eq.s32.totalorder %s30, 0
      %p135 = por %p133, %p134
      %p136 = scmp.ne.s32.totalorder %s128, %s130
      %p137 = scmp.eq.s32.totalorder %s35, 7
      %p138 = por %p136, %p137
      %p139 = scmp.ne.s32.totalorder %s130, %s131
      %p140 = scmp.eq.s32.totalorder %s35, 0
      %p141 = por %p139, %p140
      %p142 = scmp.ne.s32.totalorder %s130, %s131
      %p143 = scmp.eq.s32.totalorder %s36, 7
      %p144 = por %p142, %p143
      %p146 = scmp.ne.s32.totalorder %s131, %s145
      %p147 = scmp.eq.s32.totalorder %s36, 0
      %p148 = por %p146, %p147
      %s150 = sadd.s32 %s149, 1
      %p153 = scmp.eq.s32.totalorder %s30, 7
      %p154 = scmp.ne.s32.totalorder %s149, %s151
      %p155 = scmp.eq.s32.totalorder %s30, 0
      %p156 = por %p154, %p155
      %p157 = scmp.ne.s32.totalorder %s149, %s151
      %p158 = scmp.eq.s32.totalorder %s35, 7
      %p159 = por %p157, %p158
      %p160 = scmp.ne.s32.totalorder %s151, %s152
      %p161 = scmp.eq.s32.totalorder %s35, 0
      %p162 = por %p160, %p161
      %p163 = scmp.ne.s32.totalorder %s151, %s152
      %p164 = scmp.eq.s32.totalorder %s36, 7
      %p165 = por %p163, %p164
      %p167 = scmp.ne.s32.totalorder %s152, %s166
      %p168 = scmp.eq.s32.totalorder %s36, 0
      %p169 = por %p167, %p168
      %s171 = sadd.s32 %s170, 1
      %p174 = scmp.eq.s32.totalorder %s30, 7
      %p175 = scmp.ne.s32.totalorder %s170, %s172
      %p176 = scmp.eq.s32.totalorder %s30, 0
      %p177 = por %p175, %p176
      %p178 = scmp.ne.s32.totalorder %s170, %s172
      %p179 = scmp.eq.s32.totalorder %s35, 7
      %p180 = por %p178, %p179
      %p181 = scmp.ne.s32.totalorder %s172, %s173
      %p182 = scmp.eq.s32.totalorder %s35, 0
      %p183 = por %p181, %p182
      %p184 = scmp.ne.s32.totalorder %s172, %s173
      %p185 = scmp.eq.s32.totalorder %s36, 7
      %p186 = por %p184, %p185
      %p188 = scmp.ne.s32.totalorder %s173, %s187
      %p189 = scmp.eq.s32.totalorder %s36, 0
      %p190 = por %p188, %p189
      %s192 = sadd.s32 %s191, 1
      %p195 = scmp.eq.s32.totalorder %s30, 7
      %p196 = scmp.ne.s32.totalorder %s191, %s193
      %p197 = scmp.eq.s32.totalorder %s30, 0
      %p198 = por %p196, %p197
      %p199 = scmp.ne.s32.totalorder %s191, %s193
      %p200 = scmp.eq.s32.totalorder %s35, 7
      %p201 = por %p199, %p200
      %p202 = scmp.ne.s32.totalorder %s193, %s194
      %p203 = scmp.eq.s32.totalorder %s35, 0
      %p204 = por %p202, %p203
      %p205 = scmp.ne.s32.totalorder %s193, %s194
      %p206 = scmp.eq.s32.totalorder %s36, 7
      %p207 = por %p205, %p206
      %p209 = scmp.ne.s32.totalorder %s194, %s208
      %p210 = scmp.eq.s32.totalorder %s36, 0
      %p211 = por %p209, %p210
      %s213 = sadd.s32 %s212, 1
      %p216 = scmp.eq.s32.totalorder %s30, 7
      %p217 = scmp.ne.s32.totalorder %s212, %s214
      %p218 = scmp.eq.s32.totalorder %s30, 0
      %p219 = por %p217, %p218
      %p220 = scmp.ne.s32.totalorder %s212, %s214
      %p221 = scmp.eq.s32.totalorder %s35, 7
      %p222 = por %p220, %p221
      %p223 = scmp.ne.s32.totalorder %s214, %s215
      %p224 = scmp.eq.s32.totalorder %s35, 0
      %p225 = por %p223, %p224
      %p226 = scmp.ne.s32.totalorder %s214, %s215
      %p227 = scmp.eq.s32.totalorder %s36, 7
      %p228 = por %p226, %p227
      %p230 = scmp.ne.s32.totalorder %s215, %s229
      %p231 = scmp.eq.s32.totalorder %s36, 0
      %p232 = por %p230, %p231
      %s234 = sadd.s32 %s233, 1
      %p237 = scmp.eq.s32.totalorder %s30, 7
      %p238 = scmp.ne.s32.totalorder %s233, %s235
      %p239 = scmp.eq.s32.totalorder %s30, 0
      %p240 = por %p238, %p239
      %p241 = scmp.ne.s32.totalorder %s233, %s235
      %p242 = scmp.eq.s32.totalorder %s35, 7
      %p243 = por %p241, %p242
      %p244 = scmp.ne.s32.totalorder %s235, %s236
      %p245 = scmp.eq.s32.totalorder %s35, 0
      %p246 = por %p244, %p245
      %p247 = scmp.ne.s32.totalorder %s235, %s236
      %p248 = scmp.eq.s32.totalorder %s36, 7
      %p249 = por %p247, %p248
      %p251 = scmp.ne.s32.totalorder %s236, %s250
      %p252 = scmp.eq.s32.totalorder %s36, 0
      %p253 = por %p251, %p252
      %s254 = ssub.s32 %s37, %s49
      %p255 = scmp.eq.s32.totalorder %s254, 0
      %s257 = sadd.s32 %s256, 1
      %s258 = scalar_select %p255, %s256, %s257
      %p261 = pneg %p255
      %p262 = scmp.eq.s32.totalorder %s30, 7
      %p263 = por %p261, %p262
      %p264 = scmp.ne.s32.totalorder %s256, %s259
      %p265 = scmp.eq.s32.totalorder %s30, 0
      %p266 = por %p264, %p265
      %p267 = scmp.ne.s32.totalorder %s256, %s259
      %p268 = scmp.eq.s32.totalorder %s35, 7
      %p269 = por %p267, %p268
      %p270 = scmp.ne.s32.totalorder %s259, %s260
      %p271 = scmp.eq.s32.totalorder %s35, 0
      %p272 = por %p270, %p271
      %p273 = scmp.ne.s32.totalorder %s259, %s260
      %p274 = scmp.eq.s32.totalorder %s36, 7
      %p275 = por %p273, %p274
      %p277 = scmp.ne.s32.totalorder %s260, %s276
      %p278 = scmp.eq.s32.totalorder %s36, 0
      %p279 = por %p277, %p278
      %s280 = ssub.s32 %s37, %s49
      %s281 = ssub.s32 %s38, %s45
      %s282 = sor.u32 %s280, %s281
      %p283 = scmp.eq.s32.totalorder %s282, 0
      %s285 = sadd.s32 %s284, 1
      %s286 = scalar_select %p283, %s284, %s285
      %p289 = pneg %p283
      %p290 = scmp.eq.s32.totalorder %s30, 7
      %p291 = por %p289, %p290
      %p292 = scmp.ne.s32.totalorder %s284, %s287
      %p293 = scmp.eq.s32.totalorder %s30, 0
      %p294 = por %p292, %p293
      %p295 = scmp.ne.s32.totalorder %s284, %s287
      %p296 = scmp.eq.s32.totalorder %s35, 7
      %p297 = por %p295, %p296
      %p298 = scmp.ne.s32.totalorder %s287, %s288
      %p299 = scmp.eq.s32.totalorder %s35, 0
      %p300 = por %p298, %p299
      %p301 = scmp.ne.s32.totalorder %s287, %s288
      %p302 = scmp.eq.s32.totalorder %s36, 7
      %p303 = por %p301, %p302
      %p305 = scmp.ne.s32.totalorder %s288, %s304
      %p306 = scmp.eq.s32.totalorder %s36, 0
      %p307 = por %p305, %p306
      %p308 = scmp.le.s32.totalorder 1, %s30
      %p309 = scmp.lt.s32.totalorder %s30, 9
      %p310 = pnand %p308, %p309
      %p311 = pneg %p310
      // Predicated region
      $region9: #{tpu_custom_call.1} parent=5 // pred_check
        _
      $region10: #{tpu_custom_call.1} parent=5 // pred_check_branch
        %313 = sbr.rel (%p310) target = $region12
      $region11: #{tpu_custom_call.1} parent=5 // pred_region
        %s314 = ssub.s32 %s30, 1
        // Predicated region
        $region13: #{tpu_custom_call.1} parent=11 // pred_check
          %p315 = pneg %p141
        $region14: #{tpu_custom_call.1} parent=11 // pred_check_branch
          %317 = sbr.rel (%p315) target = $region16
        $region15: #{tpu_custom_call.1} parent=11 // pred_region
          %s319 = ssub.s32 256, 256
          %320 = vsyncadd [#allocation12], %s319
          %s321 = sshll.u32 [#allocation11], 4
          %s322 = int_to_ptr.vmem [resolvable:$true] %s321
          %327 = dma.hbm_to_vmem [thread:$0]  %s3, 256, %s322, [#allocation12], 64, 64, 4
        $region16: #{tpu_custom_call.1} parent=11 // pred_fallthru
          _
        // Predicated region
        $region17: #{tpu_custom_call.1} parent=11 // pred_check
          %p328 = pneg %p162
        $region18: #{tpu_custom_call.1} parent=11 // pred_check_branch
          %330 = sbr.rel (%p328) target = $region20
        $region19: #{tpu_custom_call.1} parent=11 // pred_region
          %s332 = ssub.s32 256, 256
          %333 = vsyncadd [#allocation12], %s332
          %s334 = sshll.u32 [#allocation13], 4
          %s335 = int_to_ptr.vmem [resolvable:$true] %s334
          %340 = dma.hbm_to_vmem [thread:$0]  %s4, 256, %s335, [#allocation12], 64, 64, 4
        $region20: #{tpu_custom_call.1} parent=11 // pred_fallthru
          _
        // Predicated region
        $region21: #{tpu_custom_call.1} parent=11 // pred_check
          %p341 = pneg %p183
        $region22: #{tpu_custom_call.1} parent=11 // pred_check_branch
          %343 = sbr.rel (%p341) target = $region24
        $region23: #{tpu_custom_call.1} parent=11 // pred_region
          _
        $region24: #{tpu_custom_call.1} parent=11 // pred_fallthru
          _
        // Predicated region
        $region25: #{tpu_custom_call.1} parent=11 // pred_check
          %p344 = pneg %p204
        $region26: #{tpu_custom_call.1} parent=11 // pred_check_branch
          %346 = sbr.rel (%p344) target = $region28
        $region27: #{tpu_custom_call.1} parent=11 // pred_region
          _
        $region28: #{tpu_custom_call.1} parent=11 // pred_fallthru
          _
        // Predicated region
        $region29: #{tpu_custom_call.1} parent=11 // pred_check
          %p347 = pneg %p225
        $region30: #{tpu_custom_call.1} parent=11 // pred_check_branch
          %349 = sbr.rel (%p347) target = $region32
        $region31: #{tpu_custom_call.1} parent=11 // pred_region
          _
        $region32: #{tpu_custom_call.1} parent=11 // pred_fallthru
          _
        // Predicated region
        $region33: #{tpu_custom_call.1} parent=11 // pred_check
          %p350 = pneg %p246
        $region34: #{tpu_custom_call.1} parent=11 // pred_check_branch
          %352 = sbr.rel (%p350) target = $region36
        $region35: #{tpu_custom_call.1} parent=11 // pred_region
          _
        $region36: #{tpu_custom_call.1} parent=11 // pred_fallthru
          _
      $region12: #{tpu_custom_call.1} parent=5 // pred_fallthru
        _
      %p353 = scmp.lt.s32.totalorder %s30, 8
      // Predicated region
      $region37: #{tpu_custom_call.1} parent=5 // pred_check
        %p354 = pneg %p353
      $region38: #{tpu_custom_call.1} parent=5 // pred_check_branch
        %356 = sbr.rel (%p354) target = $region40
      $region39: #{tpu_custom_call.1} parent=5 // pred_region
        // Predicated region
        $region41: #{tpu_custom_call.1} parent=39 // pred_check
          %p357 = pneg %p62
        $region42: #{tpu_custom_call.1} parent=39 // pred_check_branch
          %359 = sbr.rel (%p357) target = $region44
        $region43: #{tpu_custom_call.1} parent=39 // pred_region
          %s360 = sand.u32 %s52, 1
          %s361 = scalar_lea.sflag [#allocation6], %s360
          %s362 = sand.u32 %s52, 1
          %s363 = smul.addr %s362, 8
          %s364 = scalar_lea.vmem [#allocation5], %s363
          %s366 = ssub.s32 128, 128
          %367 = vsyncadd %s361, %s366
          %s368 = smul.addr %s37, 128
          %s369 = scalar_lea.hbm %s0, %s368
          %s371 = sshll.u32 %s364, 4
          %s372 = int_to_ptr.vmem [resolvable:$true] %s371
          %374 = dma.hbm_to_vmem [thread:$0]  %s369, 128, %s372, %s361
        $region44: #{tpu_custom_call.1} parent=39 // pred_fallthru
          _
        // Predicated region
        $region45: #{tpu_custom_call.1} parent=39 // pred_check
          %p375 = pneg %p88
        $region46: #{tpu_custom_call.1} parent=39 // pred_check_branch
          %377 = sbr.rel (%p375) target = $region48
        $region47: #{tpu_custom_call.1} parent=39 // pred_region
          %s378 = sand.u32 %s30, 1
          %s379 = scalar_lea.sflag [#allocation9], %s378
          %s380 = sand.u32 %s78, 1
          %s381 = smul.addr %s380, 8
          %s382 = scalar_lea.vmem [#allocation8], %s381
          %s384 = ssub.s32 128, 128
          %385 = vsyncadd %s379, %s384
          %s386 = smul.addr %s37, 128
          %s387 = scalar_lea.hbm %s1, %s386
          %s389 = sshll.u32 %s382, 4
          %s390 = int_to_ptr.vmem [resolvable:$true] %s389
          %392 = dma.hbm_to_vmem [thread:$0]  %s387, 128, %s390, %s379
        $region48: #{tpu_custom_call.1} parent=39 // pred_fallthru
          _
        // Predicated region
        $region49: #{tpu_custom_call.1} parent=39 // pred_check
          %p393 = pneg %p114
        $region50: #{tpu_custom_call.1} parent=39 // pred_check_branch
          %395 = sbr.rel (%p393) target = $region52
        $region51: #{tpu_custom_call.1} parent=39 // pred_region
          %s396 = sand.u32 %s30, 1
          %s397 = scalar_lea.sflag [#allocation9], %s396
          %s398 = sand.u32 %s104, 1
          %s399 = smul.addr %s398, 8
          %s400 = scalar_lea.vmem [#allocation10], %s399
          %s402 = ssub.s32 128, 128
          %403 = vsyncadd %s397, %s402
          %s404 = smul.addr %s37, 128
          %s405 = scalar_lea.hbm %s2, %s404
          %s407 = sshll.u32 %s400, 4
          %s408 = int_to_ptr.vmem [resolvable:$true] %s407
          %410 = dma.hbm_to_vmem [thread:$0]  %s405, 128, %s408, %s397
        $region52: #{tpu_custom_call.1} parent=39 // pred_fallthru
          _
      $region40: #{tpu_custom_call.1} parent=5 // pred_fallthru
        _
      %p411 = scmp.le.s32.totalorder 1, %s30
      %p412 = scmp.lt.s32.totalorder %s30, 9
      %p413 = pnand %p411, %p412
      %p414 = pneg %p413
      // Predicated region
      $region53: #{tpu_custom_call.1} parent=5 // pred_check
        _
      $region54: #{tpu_custom_call.1} parent=5 // pred_check_branch
        %416 = sbr.rel (%p413) target = $region56
      $region55: #{tpu_custom_call.1} parent=5 // pred_region
        %s417 = ssub.s32 %s30, 1
        %s418 = sand.u32 %s55, 1
        %s419 = scalar_lea.sflag [#allocation6], %s418
        %s420 = sand.u32 %s55, 1
        %s421 = smul.addr %s420, 8
        %s422 = scalar_lea.vmem [#allocation5], %s421
        // Predicated region
        $region57: #{tpu_custom_call.1} parent=55 // pred_check
          %p423 = pneg %p68
        $region58: #{tpu_custom_call.1} parent=55 // pred_check_branch
          %425 = sbr.rel (%p423) target = $region60
        $region59: #{tpu_custom_call.1} parent=55 // pred_region
          %426 = dma.done %s419, 128
        $region60: #{tpu_custom_call.1} parent=55 // pred_fallthru
          _
        %s427 = sand.u32 %s35, 1
        %s428 = scalar_lea.sflag [#allocation9], %s427
        %s429 = sand.u32 %s81, 1
        %s430 = smul.addr %s429, 8
        %s431 = scalar_lea.vmem [#allocation8], %s430
        // Predicated region
        $region61: #{tpu_custom_call.1} parent=55 // pred_check
          %p432 = pneg %p94
        $region62: #{tpu_custom_call.1} parent=55 // pred_check_branch
          %434 = sbr.rel (%p432) target = $region64
        $region63: #{tpu_custom_call.1} parent=55 // pred_region
          %435 = dma.done %s428, 128
        $region64: #{tpu_custom_call.1} parent=55 // pred_fallthru
          _
        %s436 = sand.u32 %s35, 1
        %s437 = scalar_lea.sflag [#allocation9], %s436
        %s438 = sand.u32 %s107, 1
        %s439 = smul.addr %s438, 8
        %s440 = scalar_lea.vmem [#allocation10], %s439
        // Predicated region
        $region65: #{tpu_custom_call.1} parent=55 // pred_check
          %p441 = pneg %p120
        $region66: #{tpu_custom_call.1} parent=55 // pred_check_branch
          %443 = sbr.rel (%p441) target = $region68
        $region67: #{tpu_custom_call.1} parent=55 // pred_region
          %444 = dma.done %s437, 128
        $region68: #{tpu_custom_call.1} parent=55 // pred_fallthru
          _
        // Predicated region
        $region69: #{tpu_custom_call.1} parent=55 // pred_check
          %p445 = pneg %p141
        $region70: #{tpu_custom_call.1} parent=55 // pred_check_branch
          %447 = sbr.rel (%p445) target = $region72
        $region71: #{tpu_custom_call.1} parent=55 // pred_region
          %448 = dma.done [#allocation12], 256
        $region72: #{tpu_custom_call.1} parent=55 // pred_fallthru
          _
        // Predicated region
        $region73: #{tpu_custom_call.1} parent=55 // pred_check
          %p449 = pneg %p162
        $region74: #{tpu_custom_call.1} parent=55 // pred_check_branch
          %451 = sbr.rel (%p449) target = $region76
        $region75: #{tpu_custom_call.1} parent=55 // pred_region
          %452 = dma.done [#allocation12], 256
        $region76: #{tpu_custom_call.1} parent=55 // pred_fallthru
          _
        %s453 = sand.u32 %s55, 1
        %s454 = scalar_lea.sflag [#allocation6], %s453
        %s455 = sand.u32 %s55, 1
        %s456 = smul.addr %s455, 8
        %s457 = scalar_lea.vmem [#allocation5], %s456
        %p458 = pneg %p68
        %p459 = pneg %p65
        %s460 = sand.u32 %s35, 1
        %s461 = scalar_lea.sflag [#allocation9], %s460
        %s462 = sand.u32 %s81, 1
        %s463 = smul.addr %s462, 8
        %s464 = scalar_lea.vmem [#allocation8], %s463
        %p465 = pneg %p94
        %p466 = pneg %p91
        %s467 = sand.u32 %s35, 1
        %s468 = scalar_lea.sflag [#allocation9], %s467
        %s469 = sand.u32 %s107, 1
        %s470 = smul.addr %s469, 8
        %s471 = scalar_lea.vmem [#allocation10], %s470
        %p472 = pneg %p120
        %p473 = pneg %p117
        %p474 = pneg %p141
        %p475 = pneg %p138
        %p476 = pneg %p162
        %p477 = pneg %p159
        %p478 = pneg %p183
        %p479 = pneg %p180
        %p480 = pneg %p204
        %p481 = pneg %p201
        %p482 = pneg %p225
        %p483 = pneg %p222
        %p484 = pneg %p246
        %p485 = pneg %p243
        %p486 = pneg %p272
        %p487 = pneg %p269
        %s488 = sand.u32 %s259, 1
        %s489 = scalar_lea.sflag [#allocation7], %s488
        %s490 = sand.u32 %s259, 1
        %s491 = smul.addr %s490, 8
        %s492 = scalar_lea.vmem [#allocation14], %s491
        %p493 = pneg %p300
        %p494 = pneg %p297
        %s495 = sand.u32 %s287, 1
        %s496 = scalar_lea.sflag [#allocation16], %s495
        %s497 = sand.u32 %s287, 1
        %s498 = smul.addr %s497, 4
        %s499 = scalar_lea.vmem [#allocation15], %s498
        %p501 = scmp.eq.s32.totalorder %s40, 0
        // Predicated region
        $region77: #{tpu_custom_call.1} parent=55 // pred_check
          %p502 = pneg %p501
        $region78: #{tpu_custom_call.1} parent=55 // pred_check_branch
          %504 = sbr.rel (%p502) target = $region80
        $region79: #{tpu_custom_call.1} parent=55 // pred_region
          %v505 = vld [vmem:[%s422] sm:$0xff]
          %v506 = vpack.c.bf16 %v505, %v505
          %v507 = vld [vmem:[#allocation11] sm:$0xf]
          %v508 = vld [vmem:[#allocation11 + $0x4] sm:$0xf]
          %v509 = vld [vmem:[#allocation11 + $0x8] sm:$0xf]
          %v510 = vld [vmem:[#allocation11 + $0xc] sm:$0xf]
          %v511 = vld [vmem:[%s6] sm:$0x1]
          %v513 = vlaneseq
          %v514 = vshrl.u32 %v513, 7
          %v515 = vsub.s32 0, %v514
          %v516 = vrot.slane %v511, %v515
          %v522 = vunpack.c.l.b16 %v507
          %v523 = vunpack.c.l.b16 %v508
          %v524 = vunpack.c.l.b16 %v509
          %v525 = vunpack.c.l.b16 %v510
          %v526 = vpack.c.b16 %v523, %v522
          %v527 = vpack.c.b16 %v525, %v524
          %vm530 = vcmask 261120
          %v532 = vsel %vm530, %v506, 0
          %534 = vmatprep.subr.bf16.mxu0 0
          %535 = vmatpush1.bf16.msra.mxu0 %v526
          %536 = vmatprep.subr.bf16.mxu0 0
          %537 = vmatpush1.bf16.msra.mxu0 %v527
          %538 = vmatprep.subr.bf16.mxu0 0
          %539 = vmatpush1.bf16.msra.mxu0 0
          %540 = vmatprep.subr.bf16.mxu0 0
          %541 = vmatpush1.bf16.msra.mxu0 0
          %542 = vmatprep.subr.bf16.mxu0 0
          %543 = vmatpush1.bf16.msra.mxu0 0
          %544 = vmatprep.subr.bf16.mxu0 0
          %545 = vmatpush1.bf16.msra.mxu0 0
          %546 = vmatprep.subr.bf16.mxu0 0
          %547 = vmatpush1.bf16.msra.mxu0 0
          %548 = vmatprep.subr.bf16.mxu0 0
          %549 = vmatpush1.bf16.msra.mxu0 0
          %550 = vmatprep.subr.bf16.mxu0 0
          %551 = vmatpush1.bf16.msra.mxu0 0
          %552 = vmatprep.subr.bf16.mxu0 0
          %553 = vmatpush1.bf16.msra.mxu0 0
          %554 = vmatprep.subr.bf16.mxu0 0
          %555 = vmatpush1.bf16.msra.mxu0 0
          %556 = vmatprep.subr.bf16.mxu0 0
          %557 = vmatpush1.bf16.msra.mxu0 0
          %558 = vmatprep.subr.bf16.mxu0 0
          %559 = vmatpush1.bf16.msra.mxu0 0
          %560 = vmatprep.subr.bf16.mxu0 0
          %561 = vmatpush1.bf16.msra.mxu0 0
          %562 = vmatprep.subr.bf16.mxu0 0
          %563 = vmatpush1.bf16.msra.mxu0 0
          %564 = vmatprep.subr.bf16.mxu0 0
          %565 = vmatpush1.bf16.msra.mxu0 0
          %566 = vmatprep.mubr.bf16.mxu0 0
          %567 = vmatmul.mubr.bf16.gmra.mrb[0].mxu0 %v532
          %v568 = vpop.f32.mrb[0].mxu0
          %v569 = vadd.f32 %v516, %v568
          %v570 = vpop.f32.mrb[0].mxu0
          %v571 = vpop.f32.mrb[0].mxu0
          %v572 = vpop.f32.mrb[0].mxu0
          %573 = vdwg.mxu0
          %v574 = vld [vmem:[%s431] sm:$0xff]
          %v575 = vpack.c.bf16 %v574, %v574
          %v576 = vld [vmem:[#allocation13] sm:$0xf]
          %v577 = vld [vmem:[#allocation13 + $0x4] sm:$0xf]
          %v578 = vld [vmem:[#allocation13 + $0x8] sm:$0xf]
          %v579 = vld [vmem:[#allocation13 + $0xc] sm:$0xf]
          %v580 = vld [vmem:[%s7] sm:$0x1]
          %v582 = vlaneseq
          %v583 = vshrl.u32 %v582, 7
          %v584 = vsub.s32 0, %v583
          %v585 = vrot.slane %v580, %v584
          %v591 = vunpack.c.l.b16 %v576
          %v592 = vunpack.c.l.b16 %v577
          %v593 = vunpack.c.l.b16 %v578
          %v594 = vunpack.c.l.b16 %v579
          %v595 = vpack.c.b16 %v592, %v591
          %v596 = vpack.c.b16 %v594, %v593
          %v600 = vsel %vm530, %v575, 0
          %602 = vmatprep.subr.bf16.mxu0 0
          %603 = vmatpush1.bf16.msra.mxu0 %v595
          %604 = vmatprep.subr.bf16.mxu0 0
          %605 = vmatpush1.bf16.msra.mxu0 %v596
          %606 = vmatprep.subr.bf16.mxu0 0
          %607 = vmatpush1.bf16.msra.mxu0 0
          %608 = vmatprep.subr.bf16.mxu0 0
          %609 = vmatpush1.bf16.msra.mxu0 0
          %610 = vmatprep.subr.bf16.mxu0 0
          %611 = vmatpush1.bf16.msra.mxu0 0
          %612 = vmatprep.subr.bf16.mxu0 0
          %613 = vmatpush1.bf16.msra.mxu0 0
          %614 = vmatprep.subr.bf16.mxu0 0
          %615 = vmatpush1.bf16.msra.mxu0 0
          %616 = vmatprep.subr.bf16.mxu0 0
          %617 = vmatpush1.bf16.msra.mxu0 0
          %618 = vmatprep.subr.bf16.mxu0 0
          %619 = vmatpush1.bf16.msra.mxu0 0
          %620 = vmatprep.subr.bf16.mxu0 0
          %621 = vmatpush1.bf16.msra.mxu0 0
          %622 = vmatprep.subr.bf16.mxu0 0
          %623 = vmatpush1.bf16.msra.mxu0 0
          %624 = vmatprep.subr.bf16.mxu0 0
          %625 = vmatpush1.bf16.msra.mxu0 0
          %626 = vmatprep.subr.bf16.mxu0 0
          %627 = vmatpush1.bf16.msra.mxu0 0
          %628 = vmatprep.subr.bf16.mxu0 0
          %629 = vmatpush1.bf16.msra.mxu0 0
          %630 = vmatprep.subr.bf16.mxu0 0
          %631 = vmatpush1.bf16.msra.mxu0 0
          %632 = vmatprep.subr.bf16.mxu0 0
          %633 = vmatpush1.bf16.msra.mxu0 0
          %634 = vmatprep.mubr.bf16.mxu0 0
          %635 = vmatmul.mubr.bf16.gmra.mrb[0].mxu0 %v600
          %v636 = vpop.f32.mrb[0].mxu0
          %v637 = vadd.f32 %v585, %v636
          %v638 = vpop.f32.mrb[0].mxu0
          %v639 = vpop.f32.mrb[0].mxu0
          %v640 = vpop.f32.mrb[0].mxu0
          %641 = vdwg.mxu0
          %v642 = vld [vmem:[%s440] sm:$0xff]
          %v643 = vpack.c.bf16 %v642, %v642
          %v644 = vld [vmem:[%s5] sm:$0xf]
          %v645 = vld [vmem:[%s5 + $0x4] sm:$0xf]
          %v646 = vld [vmem:[%s5 + $0x8] sm:$0xf]
          %v647 = vld [vmem:[%s5 + $0xc] sm:$0xf]
          %v648 = vld [vmem:[%s8] sm:$0x1]
          %v650 = vlaneseq
          %v651 = vshrl.u32 %v650, 7
          %v652 = vsub.s32 0, %v651
          %v653 = vrot.slane %v648, %v652
          %v659 = vunpack.c.l.b16 %v644
          %v660 = vunpack.c.l.b16 %v645
          %v661 = vunpack.c.l.b16 %v646
          %v662 = vunpack.c.l.b16 %v647
          %v663 = vpack.c.b16 %v660, %v659
          %v664 = vpack.c.b16 %v662, %v661
          %v668 = vsel %vm530, %v643, 0
          %670 = vmatprep.subr.bf16.mxu0 0
          %671 = vmatpush1.bf16.msra.mxu0 %v663
          %672 = vmatprep.subr.bf16.mxu0 0
          %673 = vmatpush1.bf16.msra.mxu0 %v664
          %674 = vmatprep.subr.bf16.mxu0 0
          %675 = vmatpush1.bf16.msra.mxu0 0
          %676 = vmatprep.subr.bf16.mxu0 0
          %677 = vmatpush1.bf16.msra.mxu0 0
          %678 = vmatprep.subr.bf16.mxu0 0
          %679 = vmatpush1.bf16.msra.mxu0 0
          %680 = vmatprep.subr.bf16.mxu0 0
          %681 = vmatpush1.bf16.msra.mxu0 0
          %682 = vmatprep.subr.bf16.mxu0 0
          %683 = vmatpush1.bf16.msra.mxu0 0
          %684 = vmatprep.subr.bf16.mxu0 0
          %685 = vmatpush1.bf16.msra.mxu0 0
          %686 = vmatprep.subr.bf16.mxu0 0
          %687 = vmatpush1.bf16.msra.mxu0 0
          %688 = vmatprep.subr.bf16.mxu0 0
          %689 = vmatpush1.bf16.msra.mxu0 0
          %690 = vmatprep.subr.bf16.mxu0 0
          %691 = vmatpush1.bf16.msra.mxu0 0
          %692 = vmatprep.subr.bf16.mxu0 0
          %693 = vmatpush1.bf16.msra.mxu0 0
          %694 = vmatprep.subr.bf16.mxu0 0
          %695 = vmatpush1.bf16.msra.mxu0 0
          %696 = vmatprep.subr.bf16.mxu0 0
          %697 = vmatpush1.bf16.msra.mxu0 0
          %698 = vmatprep.subr.bf16.mxu0 0
          %699 = vmatpush1.bf16.msra.mxu0 0
          %700 = vmatprep.subr.bf16.mxu0 0
          %701 = vmatpush1.bf16.msra.mxu0 0
          %702 = vmatprep.mubr.bf16.mxu0 0
          %703 = vmatmul.mubr.bf16.gmra.mrb[0].mxu0 %v668
          %v704 = vpop.f32.mrb[0].mxu0
          %v705 = vadd.f32 %v653, %v704
          %v706 = vpop.f32.mrb[0].mxu0
          %v707 = vpop.f32.mrb[0].mxu0
          %v708 = vpop.f32.mrb[0].mxu0
          %709 = vdwg.mxu0
          %v710 = vpack.c.bf16 %v569, %v569
          %vm711 = vcmask 60416
          %712 = vst.msk [vmem:[#allocation2] sm:$0xf] %vm711, %v710
          %v713 = vpack.c.bf16 %v637, %v637
          %714 = vst.msk [vmem:[#allocation3] sm:$0xf] %vm711, %v713
          %v715 = vpack.c.bf16 %v705, %v705
          %716 = vst.msk [vmem:[#allocation4] sm:$0xf] %vm711, %v715
          %v718 = vunpack.c.l.b16 %v710
          %v719 = vpack.c.b16 %v718, %v718
          %720 = vrot.lane.b32.xlu0 %v719, 120
          %v721 = vpop.permute.xlu0 %720
          %s723 = scalar_lea.vmem [#allocation2], 4
          %724 = vst.msk [vmem:[%s723] sm:$0xf] %vm711, %v721
          %v726 = vunpack.c.l.b16 %v713
          %v727 = vpack.c.b16 %v726, %v726
          %728 = vrot.lane.b32.xlu0 %v727, 120
          %v729 = vpop.permute.xlu0 %728
          %s731 = scalar_lea.vmem [#allocation3], 4
          %732 = vst.msk [vmem:[%s731] sm:$0xf] %vm711, %v729
          %v734 = vunpack.c.l.b16 %v715
          %v735 = vpack.c.b16 %v734, %v734
          %736 = vrot.lane.b32.xlu0 %v735, 120
          %v737 = vpop.permute.xlu0 %736
          %s739 = scalar_lea.vmem [#allocation4], 4
          %740 = vst.msk [vmem:[%s739] sm:$0xf] %vm711, %v737
          %741 = vrot.lane.b32.xlu0 %v719, 112
          %v742 = vpop.permute.xlu0 %741
          %s744 = scalar_lea.vmem [#allocation2], 8
          %745 = vst.msk [vmem:[%s744] sm:$0xf] %vm711, %v742
          %746 = vrot.lane.b32.xlu0 %v727, 112
          %v747 = vpop.permute.xlu0 %746
          %s749 = scalar_lea.vmem [#allocation3], 8
          %750 = vst.msk [vmem:[%s749] sm:$0xf] %vm711, %v747
          %751 = vrot.lane.b32.xlu0 %v735, 112
          %v752 = vpop.permute.xlu0 %751
          %s754 = scalar_lea.vmem [#allocation4], 8
          %755 = vst.msk [vmem:[%s754] sm:$0xf] %vm711, %v752
          %756 = vrot.lane.b32.xlu0 %v719, 104
          %v757 = vpop.permute.xlu0 %756
          %s759 = scalar_lea.vmem [#allocation2], 12
          %760 = vst.msk [vmem:[%s759] sm:$0xf] %vm711, %v757
          %761 = vrot.lane.b32.xlu0 %v727, 104
          %v762 = vpop.permute.xlu0 %761
          %s764 = scalar_lea.vmem [#allocation3], 12
          %765 = vst.msk [vmem:[%s764] sm:$0xf] %vm711, %v762
          %766 = vrot.lane.b32.xlu0 %v735, 104
          %v767 = vpop.permute.xlu0 %766
          %s769 = scalar_lea.vmem [#allocation4], 12
          %770 = vst.msk [vmem:[%s769] sm:$0xf] %vm711, %v767
        $region80: #{tpu_custom_call.1} parent=55 // pred_fallthru
          _
        %s771 = smul.addr %s40, 4
        %s772 = scalar_lea.vmem [#allocation2], %s771
        %v773 = vld [vmem:[%s772] sm:$0xf]
        %s774 = smul.addr %s40, 4
        %s775 = scalar_lea.vmem [#allocation3], %s774
        %v776 = vld [vmem:[%s775] sm:$0xf]
        %s777 = smul.addr %s40, 4
        %s778 = scalar_lea.vmem [#allocation4], %s777
        %v779 = vld [vmem:[%s778] sm:$0xf]
        %vm780 = vcmask 64512
        %v782 = vsel %vm780, %v773, 0
        %v785 = vsel %vm780, %v776, 0
        %787 = vmatprep.subr.bf16.mxu0 0
        %788 = vmatpush1.bf16.xpose.msra.mxu0 %v785
        %789 = vmatprep.subr.bf16.mxu0 0
        %790 = vmatpush1.bf16.xpose.msra.mxu0 0
        %791 = vmatprep.subr.bf16.mxu0 0
        %792 = vmatpush1.bf16.xpose.msra.mxu0 0
        %793 = vmatprep.subr.bf16.mxu0 0
        %794 = vmatpush1.bf16.xpose.msra.mxu0 0
        %795 = vmatprep.subr.bf16.mxu0 0
        %796 = vmatpush1.bf16.xpose.msra.mxu0 0
        %797 = vmatprep.subr.bf16.mxu0 0
        %798 = vmatpush1.bf16.xpose.msra.mxu0 0
        %799 = vmatprep.subr.bf16.mxu0 0
        %800 = vmatpush1.bf16.xpose.msra.mxu0 0
        %801 = vmatprep.subr.bf16.mxu0 0
        %802 = vmatpush1.bf16.xpose.msra.mxu0 0
        %803 = vmatprep.subr.bf16.mxu0 0
        %804 = vmatpush1.bf16.xpose.msra.mxu0 0
        %805 = vmatprep.subr.bf16.mxu0 0
        %806 = vmatpush1.bf16.xpose.msra.mxu0 0
        %807 = vmatprep.subr.bf16.mxu0 0
        %808 = vmatpush1.bf16.xpose.msra.mxu0 0
        %809 = vmatprep.subr.bf16.mxu0 0
        %810 = vmatpush1.bf16.xpose.msra.mxu0 0
        %811 = vmatprep.subr.bf16.mxu0 0
        %812 = vmatpush1.bf16.xpose.msra.mxu0 0
        %813 = vmatprep.subr.bf16.mxu0 0
        %814 = vmatpush1.bf16.xpose.msra.mxu0 0
        %815 = vmatprep.subr.bf16.mxu0 0
        %816 = vmatpush1.bf16.xpose.msra.mxu0 0
        %817 = vmatprep.subr.bf16.mxu0 0
        %818 = vmatpush1.bf16.xpose.msra.mxu0 0
        %819 = vmatprep.mubr.bf16.mxu0 0
        %820 = vmatmul.mubr.bf16.gmra.mrb[0].mxu0 %v782
        %v821 = vpop.f32.mrb[0].mxu0
        %v822 = vadd.f32 0.0, %v821
        %v823 = vpop.f32.mrb[0].mxu0
        %v824 = vpop.f32.mrb[0].mxu0
        %v825 = vpop.f32.mrb[0].mxu0
        %826 = vdwg.mxu0
        %v827 = vsel %vm780, %v822, -inf
        %828 = vmax.xlane.f32.xlu0 %v827
        %v829 = vpop.xlane.xlu0 %828
        %v830 = vsub.f32 %v822, %v829
        %v831 = vmul.f32 %v830, 1.442695
        %v832 = vpow.pop %v831
        %v833 = vsel %vm780, %v832, 0.0
        %834 = vadd.xlane.f32.xlu0 %v833
        %v835 = vpop.xlane.xlu0 %834
        %v836 = vrcp.pop %v835
        %v837 = vmul.f32 %v832, %v836
        %v838 = vpack.c.bf16 %v837, %v837
        %v840 = vsel %vm780, %v838, 0
        %vm842 = vcmask 1043456
        %v844 = vsel %vm842, %v779, 0
        %846 = vmatprep.subr.bf16.mxu0 0
        %847 = vmatpush1.bf16.msra.mxu0 %v844
        %848 = vmatprep.subr.bf16.mxu0 0
        %849 = vmatpush1.bf16.msra.mxu0 0
        %850 = vmatprep.subr.bf16.mxu0 0
        %851 = vmatpush1.bf16.msra.mxu0 0
        %852 = vmatprep.subr.bf16.mxu0 0
        %853 = vmatpush1.bf16.msra.mxu0 0
        %854 = vmatprep.subr.bf16.mxu0 0
        %855 = vmatpush1.bf16.msra.mxu0 0
        %856 = vmatprep.subr.bf16.mxu0 0
        %857 = vmatpush1.bf16.msra.mxu0 0
        %858 = vmatprep.subr.bf16.mxu0 0
        %859 = vmatpush1.bf16.msra.mxu0 0
        %860 = vmatprep.subr.bf16.mxu0 0
        %861 = vmatpush1.bf16.msra.mxu0 0
        %862 = vmatprep.subr.bf16.mxu0 0
        %863 = vmatpush1.bf16.msra.mxu0 0
        %864 = vmatprep.subr.bf16.mxu0 0
        %865 = vmatpush1.bf16.msra.mxu0 0
        %866 = vmatprep.subr.bf16.mxu0 0
        %867 = vmatpush1.bf16.msra.mxu0 0
        %868 = vmatprep.subr.bf16.mxu0 0
        %869 = vmatpush1.bf16.msra.mxu0 0
        %870 = vmatprep.subr.bf16.mxu0 0
        %871 = vmatpush1.bf16.msra.mxu0 0
        %872 = vmatprep.subr.bf16.mxu0 0
        %873 = vmatpush1.bf16.msra.mxu0 0
        %874 = vmatprep.subr.bf16.mxu0 0
        %875 = vmatpush1.bf16.msra.mxu0 0
        %876 = vmatprep.subr.bf16.mxu0 0
        %877 = vmatpush1.bf16.msra.mxu0 0
        %878 = vmatprep.mubr.bf16.mxu0 0
        %879 = vmatmul.mubr.bf16.gmra.mrb[0].mxu0 %v840
        %v880 = vpop.f32.mrb[0].mxu0
        %v881 = vadd.f32 0.0, %v880
        %v882 = vpop.f32.mrb[0].mxu0
        %v883 = vpop.f32.mrb[0].mxu0
        %v884 = vpop.f32.mrb[0].mxu0
        %885 = vdwg.mxu0
        // Predicated region
        $region81: #{tpu_custom_call.1} parent=55 // pred_check
          %p886 = pneg %p501
        $region82: #{tpu_custom_call.1} parent=55 // pred_check_branch
          %888 = sbr.rel (%p886) target = $region84
        $region83: #{tpu_custom_call.1} parent=55 // pred_region
          %889 = vst.msk [vmem:[%s492] sm:$0xff] %vm780, %v881
        $region84: #{tpu_custom_call.1} parent=55 // pred_fallthru
          _
        %p890 = scmp.eq.s32.totalorder %s40, 1
        // Predicated region
        $region85: #{tpu_custom_call.1} parent=55 // pred_check
          %p891 = pneg %p890
        $region86: #{tpu_custom_call.1} parent=55 // pred_check_branch
          %893 = sbr.rel (%p891) target = $region88
        $region87: #{tpu_custom_call.1} parent=55 // pred_region
          %895 = vrot.lane.b32.xlu0 %v881, 8
          %v896 = vpop.permute.xlu0 %895
          %vm898 = vcmask 130112
          %899 = vst.msk [vmem:[%s492] sm:$0xff] %vm898, %v896
        $region88: #{tpu_custom_call.1} parent=55 // pred_fallthru
          _
        %p900 = scmp.eq.s32.totalorder %s40, 2
        // Predicated region
        $region89: #{tpu_custom_call.1} parent=55 // pred_check
          %p901 = pneg %p900
        $region90: #{tpu_custom_call.1} parent=55 // pred_check_branch
          %903 = sbr.rel (%p901) target = $region92
        $region91: #{tpu_custom_call.1} parent=55 // pred_region
          %905 = vrot.lane.b32.xlu0 %v881, 16
          %v906 = vpop.permute.xlu0 %905
          %vm908 = vcmask 195712
          %909 = vst.msk [vmem:[%s492] sm:$0xff] %vm908, %v906
        $region92: #{tpu_custom_call.1} parent=55 // pred_fallthru
          _
        %p910 = scmp.eq.s32.totalorder %s40, 3
        // Predicated region
        $region93: #{tpu_custom_call.1} parent=55 // pred_check
          %p911 = pneg %p910
        $region94: #{tpu_custom_call.1} parent=55 // pred_check_branch
          %913 = sbr.rel (%p911) target = $region96
        $region95: #{tpu_custom_call.1} parent=55 // pred_region
          %915 = vrot.lane.b32.xlu0 %v881, 24
          %v916 = vpop.permute.xlu0 %915
          %vm918 = vcmask 261312
          %919 = vst.msk [vmem:[%s492] sm:$0xff] %vm918, %v916
        $region96: #{tpu_custom_call.1} parent=55 // pred_fallthru
          _
        %vm920 = vcmask 60416
        %921 = vst.msk [vmem:[%s499] sm:$0xf] %vm920, %v838
        %s922 = sand.u32 %s259, 1
        %s923 = scalar_lea.sflag [#allocation7], %s922
        %s924 = sand.u32 %s259, 1
        %s925 = smul.addr %s924, 8
        %s926 = scalar_lea.vmem [#allocation14], %s925
        %s927 = sand.u32 %s287, 1
        %s928 = scalar_lea.sflag [#allocation16], %s927
        %s929 = sand.u32 %s287, 1
        %s930 = smul.addr %s929, 4
        %s931 = scalar_lea.vmem [#allocation15], %s930
        // Predicated region
        $region97: #{tpu_custom_call.1} parent=55 // pred_check
          %p932 = pneg %p269
        $region98: #{tpu_custom_call.1} parent=55 // pred_check_branch
          %934 = sbr.rel (%p932) target = $region100
        $region99: #{tpu_custom_call.1} parent=55 // pred_region
          %s936 = ssub.s32 128, 128
          %937 = vsyncadd %s923, %s936
          %s938 = smul.addr %s39, 128
          %s939 = scalar_lea.hbm %s9, %s938
          %s941 = sshll.u32 %s926, 4
          %s942 = int_to_ptr.vmem [resolvable:$true] %s941
          %944 = dma.vmem_to_hbm [thread:$0]  %s942, 128, %s939, %s923
        $region100: #{tpu_custom_call.1} parent=55 // pred_fallthru
          _
        // Predicated region
        $region101: #{tpu_custom_call.1} parent=55 // pred_check
          %p945 = pneg %p297
        $region102: #{tpu_custom_call.1} parent=55 // pred_check_branch
          %947 = sbr.rel (%p945) target = $region104
        $region103: #{tpu_custom_call.1} parent=55 // pred_region
          %s949 = ssub.s32 64, 64
          %950 = vsyncadd %s928, %s949
          %s951 = smul.addr %s39, 4
          %s952 = sadd.s32 %s40, %s951
          %s953 = smul.addr %s952, 64
          %s954 = scalar_lea.hbm %s10, %s953
          %s956 = sshll.u32 %s931, 4
          %s957 = int_to_ptr.vmem [resolvable:$true] %s956
          %959 = dma.vmem_to_hbm [thread:$0]  %s957, 64, %s954, %s928
        $region104: #{tpu_custom_call.1} parent=55 // pred_fallthru
          _
      $region56: #{tpu_custom_call.1} parent=5 // pred_fallthru
        _
      %p960 = scmp.le.s32.totalorder 2, %s30
      // Predicated region
      $region105: #{tpu_custom_call.1} parent=5 // pred_check
        %p961 = pneg %p960
      $region106: #{tpu_custom_call.1} parent=5 // pred_check_branch
        %963 = sbr.rel (%p961) target = $region108
      $region107: #{tpu_custom_call.1} parent=5 // pred_region
        %s964 = ssub.s32 %s30, 2
        // Predicated region
        $region109: #{tpu_custom_call.1} parent=107 // pred_check
          %p965 = pneg %p275
        $region110: #{tpu_custom_call.1} parent=107 // pred_check_branch
          %967 = sbr.rel (%p965) target = $region112
        $region111: #{tpu_custom_call.1} parent=107 // pred_region
          %s968 = sand.u32 %s260, 1
          %s969 = scalar_lea.sflag [#allocation7], %s968
          %s970 = sand.u32 %s260, 1
          %s971 = smul.addr %s970, 8
          %s972 = scalar_lea.vmem [#allocation14], %s971
          %973 = dma.done %s969, 128
        $region112: #{tpu_custom_call.1} parent=107 // pred_fallthru
          _
        // Predicated region
        $region113: #{tpu_custom_call.1} parent=107 // pred_check
          %p974 = pneg %p303
        $region114: #{tpu_custom_call.1} parent=107 // pred_check_branch
          %976 = sbr.rel (%p974) target = $region116
        $region115: #{tpu_custom_call.1} parent=107 // pred_region
          %s977 = sand.u32 %s288, 1
          %s978 = scalar_lea.sflag [#allocation16], %s977
          %s979 = sand.u32 %s288, 1
          %s980 = smul.addr %s979, 4
          %s981 = scalar_lea.vmem [#allocation15], %s980
          %982 = dma.done %s978, 64
        $region116: #{tpu_custom_call.1} parent=107 // pred_fallthru
          _
      $region108: #{tpu_custom_call.1} parent=5 // pred_fallthru
        _
    $region6: #{tpu_custom_call.1} parent=1 // loop_footer
      %s34 = sadd.s32 1, %s30
    $region7: #{tpu_custom_call.1} parent=1 // loop_footer_branch
      %29 = sbr.rel target = $region3
    $region8: #{tpu_custom_call.1} parent=1 // loop_exit
      _
    %983 = vsyncpa [#allocation6], 1
    %s984 = scalar_lea.sflag [#allocation6], 1
    %985 = vsyncpa %s984, 1
    %986 = vsyncpa [#allocation9], 1
    %s987 = scalar_lea.sflag [#allocation9], 1
    %988 = vsyncpa %s987, 1
    %989 = vsyncpa [#allocation12], 1
    %990 = vsyncpa [#allocation7], 1
    %s991 = scalar_lea.sflag [#allocation7], 1
    %992 = vsyncpa %s991, 1
    %993 = vsyncpa [#allocation16], 1
    %s994 = scalar_lea.sflag [#allocation16], 1
    %995 = vsyncpa %s994, 1

</llo_original>
